<compile_context>
chip_gen: v7x
topology: tpu7x:2x2x1
jax: 0.10.0
libtpu: 0.0.40
codegen_flags: <defaults>
</compile_context>

<pallas_src>
import functools

import jax
import jax.numpy as jnp
from jax import lax
from jax.experimental import pallas as pl
from jax.experimental.pallas import tpu as pltpu


def cbam_kernel(x_ref, w1t_ref, b1_ref, w2t_ref, b2_ref, m_ref, shift_ref,
                o_ref, *, hw, inv_hw, inv_c):
    x = x_ref[...]                                     # (Bt, C, HWp), input dtype
    hwp = x.shape[2]

    # ---------------- ChannelGate ----------------
    # Global avg / max pool over the (padded) lane axis.  Sum accumulates in
    # f32 without materializing a full-tile f32 copy of x.
    avg = jnp.sum(x, axis=2, dtype=jnp.float32) * inv_hw           # (Bt, C)
    if hwp != hw:
        # Zero padding must not win the max when all real values are negative.
        lane = lax.broadcasted_iota(jnp.int32, x.shape, 2)
        x_for_max = jnp.where(lane < hw, x, jnp.asarray(-jnp.inf, x.dtype))
    else:
        x_for_max = x
    mx = jnp.max(x_for_max, axis=2).astype(jnp.float32)            # (Bt, C)

    # mlp(avg) + mlp(max) = (relu(avg@W1ᵀ+b1) + relu(max@W1ᵀ+b1)) @ W2ᵀ + 2·b2
    def layer1(v):
        return jnp.maximum(
            jnp.dot(v, w1t_ref[...], preferred_element_type=jnp.float32)
            + b1_ref[...], 0.0)

    hidden = layer1(avg) + layer1(mx)                               # (Bt, Ch)
    attn = (jnp.dot(hidden, w2t_ref[...], preferred_element_type=jnp.float32)
            + 2.0 * b2_ref[...])                                    # (Bt, C)
    scale_c = jax.nn.sigmoid(attn)                                  # (Bt, C) f32

    y = x * scale_c[:, :, None].astype(x.dtype)                     # (Bt, C, HWp)

    # ---------------- SpatialGate ----------------
    # Channel-wise max / mean -> (Bt, HWp), lane-dense.
    cmax = jnp.max(y, axis=1).astype(jnp.float32)
    cmean = jnp.sum(y, axis=1, dtype=jnp.float32) * inv_c

    # Lane-aligned concat (both halves are multiples of 128 lanes) and ONE
    # fused (Bt, 2*HWp) @ (2*HWp, HWp) MXU matmul against the precomputed
    # banded conv(+BN) matrix (row block 0 -> max channel, block 1 -> mean,
    # matching torch.cat((max, mean), dim=1)).
    xc = jnp.concatenate([cmax, cmean], axis=1).astype(m_ref.dtype)
    conv = (jnp.dot(xc, m_ref[...], preferred_element_type=jnp.float32)
            + shift_ref[0, 0])                                      # (Bt, HWp)
    scale_s = jax.nn.sigmoid(conv)

    o_ref[...] = (y * scale_s[:, None, :].astype(y.dtype)).astype(o_ref.dtype)


def build_spatial_conv_matrix(conv_w, bn_scale, H, W, hw_pad, dtype):
    """Banded matrix M (2*hw_pad, hw_pad) so that [max_flat | mean_flat] @ M
    reproduces the zero-padded 'same' 7x7 cross-correlation with the eval-mode
    BatchNorm scale folded into the weights.  Rows/cols >= H*W are zero."""
    KH, KW = conv_w.shape[2], conv_w.shape[3]
    wt = (conv_w[0] * bn_scale).astype(jnp.float32)                 # (2, KH, KW)

    h = jnp.arange(H)[:, None, None, None]
    w = jnp.arange(W)[None, :, None, None]
    dh = (jnp.arange(KH) - KH // 2)[None, None, :, None]
    dw = (jnp.arange(KW) - KW // 2)[None, None, None, :]
    src_h = h + dh
    src_w = w + dw
    valid = (src_h >= 0) & (src_h < H) & (src_w >= 0) & (src_w < W)  # (H,W,KH,KW)

    p_out = jnp.broadcast_to(h * W + w, (H, W, KH, KW)).reshape(-1)
    p_in = jnp.where(valid, src_h * W + src_w, 0).reshape(-1)

    m = jnp.zeros((2, hw_pad, hw_pad), jnp.float32)
    for c in range(2):
        vals = jnp.where(valid, wt[c][None, None, :, :], 0.0).reshape(-1)
        m = m.at[c, p_in, p_out].add(vals)
    return m.reshape(2 * hw_pad, hw_pad).astype(dtype)


def _choose_batch_tile(B, C, hw_pad, itemsize, max_tile_bytes=4 << 20):
    """Largest divisor Bt of B such that the per-step x tile stays under
    max_tile_bytes (per-generation knob; conservative for v5e's 16 MiB scoped
    VMEM default) and, when B > 1, the grid keeps >= 2 steps so v7x can shard
    the batch across its two TensorCores."""
    best = 1
    for bt in range(1, B + 1):
        if B % bt:
            continue
        if B > 1 and B // bt < 2:
            continue
        if bt * C * hw_pad * itemsize > max_tile_bytes:
            continue
        best = bt
    return best


def cbam_pallas(x, params, reduction_ratio=16, conv_mat_dtype=jnp.bfloat16):
    B, C, H, W = x.shape
    HW = H * W
    HWp = ((HW + 127) // 128) * 128          # lane-align the spatial axis
    Ch = C // reduction_ratio
    eps = 1e-5

    # MLP weights, transposed once in the wrapper for row-major matmuls.
    w1t = params["w1"].T.astype(jnp.float32)                # (C, Ch)
    b1 = params["b1"].reshape(1, Ch).astype(jnp.float32)
    w2t = params["w2"].T.astype(jnp.float32)                # (Ch, C)
    b2 = params["b2"].reshape(1, C).astype(jnp.float32)

    # Fold eval-mode BatchNorm (1 channel) into the conv matrix / shift scalar.
    bn_scale = params["gamma"] / jnp.sqrt(params["rv"] + eps)
    m_cat = build_spatial_conv_matrix(params["conv_w"], bn_scale, H, W, HWp,
                                      conv_mat_dtype)       # (2*HWp, HWp)
    shift = (params["beta"] - params["rm"] * bn_scale).reshape(1, 1) \
        .astype(jnp.float32)

    x2 = x.reshape(B, C, HW)
    if HWp != HW:
        x2 = jnp.pad(x2, ((0, 0), (0, 0), (0, HWp - HW)))

    Bt = _choose_batch_tile(B, C, HWp, x2.dtype.itemsize)
    grid = (B // Bt,)

    kernel = functools.partial(cbam_kernel, hw=HW, inv_hw=1.0 / HW, inv_c=1.0 / C)

    # VMEM budget: double-buffered x/out tiles + single-buffered conv matrix
    # and weights, with generous headroom (floor at the v5e 16 MiB default).
    tile_bytes = Bt * C * HWp * x2.dtype.itemsize
    m_bytes = m_cat.size * m_cat.dtype.itemsize
    w_bytes = 4 * (w1t.size + b1.size + w2t.size + b2.size)
    need = 2 * 2 * tile_bytes + m_bytes + w_bytes
    vmem_limit = int(max(min(2 * need + (4 << 20), 64 << 20), 16 << 20))

    single = pl.Buffered(1)   # grid-invariant inputs: one VMEM copy, fetched once

    out2 = pl.pallas_call(
        kernel,
        out_shape=jax.ShapeDtypeStruct((B, C, HWp), x.dtype),
        grid=grid,
        in_specs=[
            pl.BlockSpec((Bt, C, HWp), lambda b: (b, 0, 0)),            # x
            pl.BlockSpec((C, Ch), lambda b: (0, 0), pipeline_mode=single),   # w1ᵀ
            pl.BlockSpec((1, Ch), lambda b: (0, 0), pipeline_mode=single),   # b1
            pl.BlockSpec((Ch, C), lambda b: (0, 0), pipeline_mode=single),   # w2ᵀ
            pl.BlockSpec((1, C), lambda b: (0, 0), pipeline_mode=single),    # b2
            pl.BlockSpec((2 * HWp, HWp), lambda b: (0, 0),
                         pipeline_mode=single),                         # conv matrix
            pl.BlockSpec(memory_space=pltpu.MemorySpace.SMEM),          # BN shift
        ],
        out_specs=pl.BlockSpec((Bt, C, HWp), lambda b: (b, 0, 0)),
        compiler_params=pltpu.CompilerParams(
            dimension_semantics=("parallel",),
            vmem_limit_bytes=vmem_limit),
    )(x2, w1t, b1, w2t, b2, m_cat, shift)

    out = out2[:, :, :HW] if HWp != HW else out2
    return out.reshape(B, C, H, W)


def cbam_reference(x, params):
    """Pure-JAX reference matching the PyTorch forward (BN in eval mode)."""
    eps = 1e-5
    w1, b1, w2, b2 = params["w1"], params["b1"], params["w2"], params["b2"]
    avg = jnp.mean(x, axis=(2, 3))
    mx = jnp.max(x, axis=(2, 3))

    def mlp(v):
        return jax.nn.relu(v @ w1.T + b1) @ w2.T + b2

    attn = mlp(avg) + mlp(mx)
    y = x * jax.nn.sigmoid(attn)[:, :, None, None]

    comp = jnp.concatenate(
        [jnp.max(y, axis=1, keepdims=True), jnp.mean(y, axis=1, keepdims=True)],
        axis=1)
    conv = lax.conv_general_dilated(
        comp, params["conv_w"], window_strides=(1, 1),
        padding=((3, 3), (3, 3)), dimension_numbers=("NCHW", "OIHW", "NCHW"))
    bn = (conv - params["rm"]) / jnp.sqrt(params["rv"] + eps) * params["gamma"] \
        + params["beta"]
    return y * jax.nn.sigmoid(bn)


def init_params(C, reduction_ratio, key):
    Ch = C // reduction_ratio
    ks = jax.random.split(key, 5)
    return {
        # nn.Linear(C, C//r) weight (Ch, C), bias (Ch,)
        "w1": jax.random.normal(ks[0], (Ch, C), jnp.float32) * 0.2,
        "b1": jax.random.normal(ks[1], (Ch,), jnp.float32) * 0.1,
        # nn.Linear(C//r, C) weight (C, Ch), bias (C,)
        "w2": jax.random.normal(ks[2], (C, Ch), jnp.float32) * 0.2,
        "b2": jax.random.normal(ks[3], (C,), jnp.float32) * 0.1,
        # nn.Conv2d(2, 1, 7, padding=3, bias=False) weight (1, 2, 7, 7)
        "conv_w": jax.random.normal(ks[4], (1, 2, 7, 7), jnp.float32) * 0.1,
        # BatchNorm2d(1) eval-mode parameters / running stats
        "gamma": jnp.float32(1.2),
        "beta": jnp.float32(0.1),
        "rm": jnp.float32(0.05),
        "rv": jnp.float32(0.9),
    }


if __name__ == "__main__":
    B, C, H, W = 4, 32, 16, 16        # gate_channels=32, reduction_ratio=16
    key = jax.random.PRNGKey(0)
    kx, kp = jax.random.split(key)
    x = jax.random.normal(kx, (B, C, H, W), jnp.float32)
    params = init_params(C, 16, kp)

    ref = cbam_reference(x, params)

    # Exact-semantics path: f32 conv matrix (tight tolerance).
    out_f32 = cbam_pallas(x, params, conv_mat_dtype=jnp.float32)
    jax.block_until_ready(out_f32)
    assert out_f32.shape == x.shape and out_f32.dtype == x.dtype
    err_f32 = float(jnp.max(jnp.abs(out_f32 - ref)))
    assert err_f32 < 1e-3, f"f32 conv-matrix max_err={err_f32}"

    # Default perf path: bf16 conv matrix (halves its HBM/VMEM cost, native
    # MXU rate); looser tolerance to absorb the bf16 quantization of the 7x7
    # weights / compressed maps.
    out = cbam_pallas(x, params)
    jax.block_until_ready(out)
    assert out.shape == x.shape and out.dtype == x.dtype
    err_bf16 = float(jnp.max(jnp.abs(out - ref)))
    assert err_bf16 < 5e-2, f"bf16 conv-matrix max_err={err_bf16}"

    print("KERNEL_OK")
</pallas_src>

<mosaic_0001>
module attributes {stable_mosaic.version = 11 : i64} {
  func.func @cbam_kernel(%arg0: i32, %arg1: memref<2x32x256xf32, #tpu.memory_space<vmem>>, %arg2: memref<32x2xf32, #tpu.memory_space<vmem>>, %arg3: memref<1x2xf32, #tpu.memory_space<vmem>>, %arg4: memref<2x32xf32, #tpu.memory_space<vmem>>, %arg5: memref<1x32xf32, #tpu.memory_space<vmem>>, %arg6: memref<512x256xf32, #tpu.memory_space<vmem>>, %arg7: memref<1x1xf32, #tpu.memory_space<smem>>, %arg8: memref<2x32x256xf32, #tpu.memory_space<vmem>>) attributes {dimension_semantics = [#tpu.dimension_semantics<parallel>], iteration_bounds = array<i64: 2>, scalar_prefetch = 0 : i64, scratch_operands = 0 : i64, tpu.core_type = #tpu.core_type<tc>, window_params = [{transform_indices = @transform_0, window_bounds = array<i64: 2, 32, 256>}, {pipeline_mode = #tpu.pipeline_mode<synchronous>, transform_indices = @transform_1, window_bounds = array<i64: 32, 2>}, {pipeline_mode = #tpu.pipeline_mode<synchronous>, transform_indices = @transform_2, window_bounds = array<i64: 1, 2>}, {pipeline_mode = #tpu.pipeline_mode<synchronous>, transform_indices = @transform_3, window_bounds = array<i64: 2, 32>}, {pipeline_mode = #tpu.pipeline_mode<synchronous>, transform_indices = @transform_4, window_bounds = array<i64: 1, 32>}, {pipeline_mode = #tpu.pipeline_mode<synchronous>, transform_indices = @transform_5, window_bounds = array<i64: 512, 256>}, {transform_indices = @transform_6, window_bounds = array<i64: 1, 1>}, {transform_indices = @transform_7, window_bounds = array<i64: 2, 32, 256>}]} {
    %c0 = arith.constant 0 : index
    %c0_0 = arith.constant 0 : index
    %c0_1 = arith.constant 0 : index
    %0 = vector.load %arg1[%c0, %c0_0, %c0_1] : memref<2x32x256xf32, #tpu.memory_space<vmem>>, vector<2x32x256xf32>
    %cst = arith.constant dense<0.000000e+00> : vector<2x32xf32>
    %1 = vector.multi_reduction <add>, %0, %cst [2] : vector<2x32x256xf32> to vector<2x32xf32>
    %cst_2 = arith.constant 3.906250e-03 : f32
    %2 = vector.broadcast %cst_2 : f32 to vector<2x32xf32>
    %3 = arith.mulf %1, %2 : vector<2x32xf32>
    %cst_3 = arith.constant dense<0xFF800000> : vector<2x32xf32>
    %4 = vector.multi_reduction <maximumf>, %0, %cst_3 [2] : vector<2x32x256xf32> to vector<2x32xf32>
    %c0_4 = arith.constant 0 : index
    %c0_5 = arith.constant 0 : index
    %5 = vector.load %arg2[%c0_4, %c0_5] : memref<32x2xf32, #tpu.memory_space<vmem>>, vector<32x2xf32>
    %cst_6 = arith.constant dense<0.000000e+00> : vector<2x2xf32>
    %6 = tpu.matmul %3, %5, %cst_6 {dimension_numbers = #tpu.dot_dimension_numbers<[1], [0], [0], [1], [0, 0, 1, 1], [], []>} : vector<2x32xf32>, vector<32x2xf32>, vector<2x2xf32> -> vector<2x2xf32>
    %c0_7 = arith.constant 0 : index
    %c0_8 = arith.constant 0 : index
    %7 = vector.load %arg3[%c0_7, %c0_8] : memref<1x2xf32, #tpu.memory_space<vmem>>, vector<1x2xf32>
    %8 = vector.broadcast %7 : vector<1x2xf32> to vector<2x2xf32>
    %9 = arith.addf %6, %8 : vector<2x2xf32>
    %cst_9 = arith.constant 0.000000e+00 : f32
    %10 = vector.broadcast %cst_9 : f32 to vector<2x2xf32>
    %11 = arith.maximumf %9, %10 : vector<2x2xf32>
    %c0_10 = arith.constant 0 : index
    %c0_11 = arith.constant 0 : index
    %12 = vector.load %arg2[%c0_10, %c0_11] : memref<32x2xf32, #tpu.memory_space<vmem>>, vector<32x2xf32>
    %cst_12 = arith.constant dense<0.000000e+00> : vector<2x2xf32>
    %13 = tpu.matmul %4, %12, %cst_12 {dimension_numbers = #tpu.dot_dimension_numbers<[1], [0], [0], [1], [0, 0, 1, 1], [], []>} : vector<2x32xf32>, vector<32x2xf32>, vector<2x2xf32> -> vector<2x2xf32>
    %c0_13 = arith.constant 0 : index
    %c0_14 = arith.constant 0 : index
    %14 = vector.load %arg3[%c0_13, %c0_14] : memref<1x2xf32, #tpu.memory_space<vmem>>, vector<1x2xf32>
    %15 = vector.broadcast %14 : vector<1x2xf32> to vector<2x2xf32>
    %16 = arith.addf %13, %15 : vector<2x2xf32>
    %cst_15 = arith.constant 0.000000e+00 : f32
    %17 = vector.broadcast %cst_15 : f32 to vector<2x2xf32>
    %18 = arith.maximumf %16, %17 : vector<2x2xf32>
    %19 = arith.addf %11, %18 : vector<2x2xf32>
    %c0_16 = arith.constant 0 : index
    %c0_17 = arith.constant 0 : index
    %20 = vector.load %arg4[%c0_16, %c0_17] : memref<2x32xf32, #tpu.memory_space<vmem>>, vector<2x32xf32>
    %cst_18 = arith.constant dense<0.000000e+00> : vector<2x32xf32>
    %21 = tpu.matmul %19, %20, %cst_18 {dimension_numbers = #tpu.dot_dimension_numbers<[1], [0], [0], [1], [0, 0, 1, 1], [], []>} : vector<2x2xf32>, vector<2x32xf32>, vector<2x32xf32> -> vector<2x32xf32>
    %c0_19 = arith.constant 0 : index
    %c0_20 = arith.constant 0 : index
    %22 = vector.load %arg5[%c0_19, %c0_20] : memref<1x32xf32, #tpu.memory_space<vmem>>, vector<1x32xf32>
    %cst_21 = arith.constant 2.000000e+00 : f32
    %23 = vector.broadcast %cst_21 : f32 to vector<1x32xf32>
    %24 = arith.mulf %23, %22 : vector<1x32xf32>
    %25 = vector.broadcast %24 : vector<1x32xf32> to vector<2x32xf32>
    %26 = arith.addf %21, %25 : vector<2x32xf32>
    %27 = arith.negf %26 : vector<2x32xf32>
    %28 = math.exp %27 : vector<2x32xf32>
    %cst_22 = arith.constant 1.000000e+00 : f32
    %29 = vector.broadcast %cst_22 : f32 to vector<2x32xf32>
    %30 = arith.addf %29, %28 : vector<2x32xf32>
    %31 = arith.divf %29, %30 : vector<2x32xf32>
    %32 = vector.shape_cast %31 : vector<2x32xf32> to vector<2x32x1xf32>
    %33 = vector.broadcast %32 : vector<2x32x1xf32> to vector<2x32x256xf32>
    %34 = arith.mulf %0, %33 : vector<2x32x256xf32>
    %cst_23 = arith.constant dense<0xFF800000> : vector<2x256xf32>
    %35 = vector.multi_reduction <maximumf>, %34, %cst_23 [1] : vector<2x32x256xf32> to vector<2x256xf32>
    %cst_24 = arith.constant dense<0.000000e+00> : vector<2x256xf32>
    %36 = vector.multi_reduction <add>, %34, %cst_24 [1] : vector<2x32x256xf32> to vector<2x256xf32>
    %cst_25 = arith.constant 3.125000e-02 : f32
    %37 = vector.broadcast %cst_25 : f32 to vector<2x256xf32>
    %38 = arith.mulf %36, %37 : vector<2x256xf32>
    %39 = tpu.concatenate %35, %38 in 1 : vector<2x256xf32>, vector<2x256xf32> -> vector<2x512xf32>
    %c0_26 = arith.constant 0 : index
    %c0_27 = arith.constant 0 : index
    %40 = vector.load %arg6[%c0_26, %c0_27] : memref<512x256xf32, #tpu.memory_space<vmem>>, vector<512x256xf32>
    %cst_28 = arith.constant dense<0.000000e+00> : vector<2x256xf32>
    %41 = tpu.matmul %39, %40, %cst_28 {dimension_numbers = #tpu.dot_dimension_numbers<[1], [0], [0], [1], [0, 0, 1, 1], [], []>} : vector<2x512xf32>, vector<512x256xf32>, vector<2x256xf32> -> vector<2x256xf32>
    %c0_29 = arith.constant 0 : index
    %c0_30 = arith.constant 0 : index
    %42 = memref.load %arg7[%c0_29, %c0_30] : memref<1x1xf32, #tpu.memory_space<smem>>
    %43 = vector.broadcast %42 : f32 to vector<2x256xf32>
    %44 = arith.addf %41, %43 : vector<2x256xf32>
    %45 = arith.negf %44 : vector<2x256xf32>
    %46 = math.exp %45 : vector<2x256xf32>
    %cst_31 = arith.constant 1.000000e+00 : f32
    %47 = vector.broadcast %cst_31 : f32 to vector<2x256xf32>
    %48 = arith.addf %47, %46 : vector<2x256xf32>
    %49 = arith.divf %47, %48 : vector<2x256xf32>
    %50 = vector.shape_cast %49 : vector<2x256xf32> to vector<2x1x256xf32>
    %51 = vector.broadcast %50 : vector<2x1x256xf32> to vector<2x32x256xf32>
    %52 = arith.mulf %34, %51 : vector<2x32x256xf32>
    %c0_32 = arith.constant 0 : index
    %c0_33 = arith.constant 0 : index
    %c0_34 = arith.constant 0 : index
    %53 = vector.load %arg8[%c0_32, %c0_33, %c0_34] : memref<2x32x256xf32, #tpu.memory_space<vmem>>, vector<2x32x256xf32>
    tpu.vector_store %arg8[%c0_32, %c0_33, %c0_34], %52 {strides = array<i32>} : memref<2x32x256xf32, #tpu.memory_space<vmem>>, vector<2x32x256xf32>,
    return
  }
  func.func @transform_0(%arg0: i32) -> (i32, i32, i32) {
    %c0_i32 = arith.constant 0 : i32
    %c0_i32_0 = arith.constant 0 : i32
    %c0_i32_1 = arith.constant 0 : i32
    return %arg0, %c0_i32, %c0_i32_0 : i32, i32, i32
  }
  func.func @transform_1(%arg0: i32) -> (i32, i32) {
    %c0_i32 = arith.constant 0 : i32
    %c0_i32_0 = arith.constant 0 : i32
    %c0_i32_1 = arith.constant 0 : i32
    return %c0_i32, %c0_i32_0 : i32, i32
  }
  func.func @transform_2(%arg0: i32) -> (i32, i32) {
    %c0_i32 = arith.constant 0 : i32
    %c0_i32_0 = arith.constant 0 : i32
    %c0_i32_1 = arith.constant 0 : i32
    return %c0_i32, %c0_i32_0 : i32, i32
  }
  func.func @transform_3(%arg0: i32) -> (i32, i32) {
    %c0_i32 = arith.constant 0 : i32
    %c0_i32_0 = arith.constant 0 : i32
    %c0_i32_1 = arith.constant 0 : i32
    return %c0_i32, %c0_i32_0 : i32, i32
  }
  func.func @transform_4(%arg0: i32) -> (i32, i32) {
    %c0_i32 = arith.constant 0 : i32
    %c0_i32_0 = arith.constant 0 : i32
    %c0_i32_1 = arith.constant 0 : i32
    return %c0_i32, %c0_i32_0 : i32, i32
  }
  func.func @transform_5(%arg0: i32) -> (i32, i32) {
    %c0_i32 = arith.constant 0 : i32
    %c0_i32_0 = arith.constant 0 : i32
    %c0_i32_1 = arith.constant 0 : i32
    return %c0_i32, %c0_i32_0 : i32, i32
  }
  func.func @transform_6(%arg0: i32) -> (i32, i32) {
    %c0_i32 = arith.constant 0 : i32
    %c0_i32_0 = arith.constant 0 : i32
    %c0_i32_1 = arith.constant 0 : i32
    return %c0_i32, %c0_i32_0 : i32, i32
  }
  func.func @transform_7(%arg0: i32) -> (i32, i32, i32) {
    %c0_i32 = arith.constant 0 : i32
    %c0_i32_0 = arith.constant 0 : i32
    %c0_i32_1 = arith.constant 0 : i32
    return %arg0, %c0_i32, %c0_i32_0 : i32, i32, i32
  }
}

</mosaic_0001>

<llo_original>
// kernel: tpu_custom_call.1
$region0: #{tpu_custom_call.1}
  #allocation0 [shape = 'u32[]', space=smem, size = 0x4, offset = 0x4, fixed_abs, tag = 'smem constant byte address 0x4 - core index']
  #allocation1 [shape = 'u32[144,128]{1,0:T(1,128)}', space=vmem, size = 0x12000, scoped, tag = 'internal scratch']
  #allocation2 [shape = 'f32[1,1]{1,0:T(1,128)S(6)}', space=smem, size = 0x200, scoped, tag = 'scoped memory for tpu_custom_call.1']
  %s0 = inlined_call_operand.hbm [shape: f32[4,32,256], index: 0, kind: input, shape index: {}]
  %s1 = inlined_call_operand.vmem [shape: f32[32,2], index: 1, kind: input, shape index: {}]
  %s2 = inlined_call_operand.vmem [shape: f32[1,2], index: 2, kind: input, shape index: {}]
  %s3 = inlined_call_operand.vmem [shape: f32[2,32], index: 3, kind: input, shape index: {}]
  %s4 = inlined_call_operand.vmem [shape: f32[1,32], index: 4, kind: input, shape index: {}]
  %s5 = inlined_call_operand.hbm [shape: f32[512,256], index: 5, kind: input, shape index: {}]
  %s6 = inlined_call_operand.<no memory space> [shape: f32[1,1], index: 6, kind: input, shape index: {}]
  %s7 = inlined_call_operand.hbm [shape: f32[4,32,256], index: 7, kind: output, shape index: {}]
  %s8 = sld [smem:[#allocation0]]
  $region69: #{tpu_custom_call.1} parent=0
    _
  %s10 = ssub.s32 1, %s8
  %s11 = scalar_select 0, %s10, %s8
  %12 = sst [smem:[#allocation2]] %s6
  $region1: #{tpu_custom_call.1} parent=0
    #allocation3 [shape = 'u8[131072]{0}', space=vmem, size = 0x20000, scoped, tag = 'input window, operand 0']
    #allocation4 [shape = 's32[2]{0}', space=sflag, size = 0x8, scoped, tag = 'scoped memory for tpu_custom_call.1']
    #allocation5 [shape = 's32[2]{0}', space=sflag, size = 0x8, scoped, tag = 'scoped memory for tpu_custom_call.1']
    #allocation6 [shape = 'u8[524288]{0}', space=vmem, size = 0x80000, scoped, tag = 'input window, operand 5, single buffered']
    #allocation7 [shape = 's32[1]{0}', space=sflag, size = 0x4, scoped, tag = 'scoped memory for tpu_custom_call.1']
    #allocation8 [shape = 'u8[131072]{0}', space=vmem, size = 0x20000, scoped, tag = 'output window, operand 0']
    %13 = vsyncpa [#allocation4], 0
    %s14 = scalar_lea.sflag [#allocation4], 1
    %15 = vsyncpa %s14, 0
    %16 = vsyncpa [#allocation7], 0
    %17 = vsyncpa [#allocation5], 0
    %s18 = scalar_lea.sflag [#allocation5], 1
    %19 = vsyncpa %s18, 0
    loop: start=0, step=1, limit=4
    $region2: #{tpu_custom_call.1} parent=1 // loop_pre_header
      _
    $region3: #{tpu_custom_call.1} parent=1 // loop_header
      %s21 = sphi 0, %s25
      %p22 = scmp.ge.s32.totalorder %s21, 4
      %s31 = sphi 0, %s33
      %s34 = sphi 0, %s31
      %s35 = sphi 0, %s34
      %s51 = sphi 0, %s35
      %s55 = sphi 0, %s55
      %s57 = sphi 0, %s55
      %s58 = sphi 0, %s57
      %s72 = sphi 0, %s58
      %s76 = sphi 0, %s76
      %s78 = sphi 0, %s76
      %s79 = sphi 0, %s78
      %s93 = sphi 0, %s79
      %s97 = sphi 0, %s97
      %s99 = sphi 0, %s97
      %s100 = sphi 0, %s99
      %s114 = sphi 0, %s100
      %s118 = sphi 0, %s118
      %s120 = sphi 0, %s118
      %s121 = sphi 0, %s120
      %s135 = sphi 0, %s121
      %s139 = sphi 0, %s139
      %s141 = sphi 0, %s139
      %s142 = sphi 0, %s141
      %s156 = sphi 0, %s142
      %s160 = sphi 0, %s160
      %s162 = sphi 0, %s160
      %s163 = sphi 0, %s162
      %s177 = sphi 0, %s163
      %s183 = sphi 0, %s185
      %s186 = sphi 0, %s183
      %s187 = sphi 0, %s186
      %s203 = sphi 0, %s187
    $region4: #{tpu_custom_call.1} parent=1 // loop_header_branch
      %24 = sbr.rel (%p22) target = $region8
    $region5: #{tpu_custom_call.1} parent=1 // loop_body
      %s26 = ssub.s32 %s21, 1
      %s27 = ssub.s32 %s21, 2
      %s28 = sadd.s32 %s21, 1
      %s29 = ssub.s32 %s21, %s28
      %p30 = scmp.eq.s32.totalorder %s29, 0
      %s32 = sadd.s32 %s31, 1
      %s33 = scalar_select %p30, %s31, %s32
      %p36 = pneg %p30
      %p37 = scmp.eq.s32.totalorder %s21, 1
      %p38 = por %p36, %p37
      %p39 = scmp.ne.s32.totalorder %s31, %s34
      %p40 = scmp.eq.s32.totalorder %s21, 0
      %p41 = por %p39, %p40
      %p42 = scmp.ne.s32.totalorder %s31, %s34
      %p43 = scmp.eq.s32.totalorder %s26, 1
      %p44 = por %p42, %p43
      %p45 = scmp.ne.s32.totalorder %s34, %s35
      %p46 = scmp.eq.s32.totalorder %s26, 0
      %p47 = por %p45, %p46
      %p48 = scmp.ne.s32.totalorder %s34, %s35
      %p49 = scmp.eq.s32.totalorder %s27, 1
      %p50 = por %p48, %p49
      %p52 = scmp.ne.s32.totalorder %s35, %s51
      %p53 = scmp.eq.s32.totalorder %s27, 0
      %p54 = por %p52, %p53
      %s56 = sadd.s32 %s55, 1
      %p59 = scmp.eq.s32.totalorder %s21, 1
      %p60 = scmp.ne.s32.totalorder %s55, %s57
      %p61 = scmp.eq.s32.totalorder %s21, 0
      %p62 = por %p60, %p61
      %p63 = scmp.ne.s32.totalorder %s55, %s57
      %p64 = scmp.eq.s32.totalorder %s26, 1
      %p65 = por %p63, %p64
      %p66 = scmp.ne.s32.totalorder %s57, %s58
      %p67 = scmp.eq.s32.totalorder %s26, 0
      %p68 = por %p66, %p67
      %p69 = scmp.ne.s32.totalorder %s57, %s58
      %p70 = scmp.eq.s32.totalorder %s27, 1
      %p71 = por %p69, %p70
      %p73 = scmp.ne.s32.totalorder %s58, %s72
      %p74 = scmp.eq.s32.totalorder %s27, 0
      %p75 = por %p73, %p74
      %s77 = sadd.s32 %s76, 1
      %p80 = scmp.eq.s32.totalorder %s21, 1
      %p81 = scmp.ne.s32.totalorder %s76, %s78
      %p82 = scmp.eq.s32.totalorder %s21, 0
      %p83 = por %p81, %p82
      %p84 = scmp.ne.s32.totalorder %s76, %s78
      %p85 = scmp.eq.s32.totalorder %s26, 1
      %p86 = por %p84, %p85
      %p87 = scmp.ne.s32.totalorder %s78, %s79
      %p88 = scmp.eq.s32.totalorder %s26, 0
      %p89 = por %p87, %p88
      %p90 = scmp.ne.s32.totalorder %s78, %s79
      %p91 = scmp.eq.s32.totalorder %s27, 1
      %p92 = por %p90, %p91
      %p94 = scmp.ne.s32.totalorder %s79, %s93
      %p95 = scmp.eq.s32.totalorder %s27, 0
      %p96 = por %p94, %p95
      %s98 = sadd.s32 %s97, 1
      %p101 = scmp.eq.s32.totalorder %s21, 1
      %p102 = scmp.ne.s32.totalorder %s97, %s99
      %p103 = scmp.eq.s32.totalorder %s21, 0
      %p104 = por %p102, %p103
      %p105 = scmp.ne.s32.totalorder %s97, %s99
      %p106 = scmp.eq.s32.totalorder %s26, 1
      %p107 = por %p105, %p106
      %p108 = scmp.ne.s32.totalorder %s99, %s100
      %p109 = scmp.eq.s32.totalorder %s26, 0
      %p110 = por %p108, %p109
      %p111 = scmp.ne.s32.totalorder %s99, %s100
      %p112 = scmp.eq.s32.totalorder %s27, 1
      %p113 = por %p111, %p112
      %p115 = scmp.ne.s32.totalorder %s100, %s114
      %p116 = scmp.eq.s32.totalorder %s27, 0
      %p117 = por %p115, %p116
      %s119 = sadd.s32 %s118, 1
      %p122 = scmp.eq.s32.totalorder %s21, 1
      %p123 = scmp.ne.s32.totalorder %s118, %s120
      %p124 = scmp.eq.s32.totalorder %s21, 0
      %p125 = por %p123, %p124
      %p126 = scmp.ne.s32.totalorder %s118, %s120
      %p127 = scmp.eq.s32.totalorder %s26, 1
      %p128 = por %p126, %p127
      %p129 = scmp.ne.s32.totalorder %s120, %s121
      %p130 = scmp.eq.s32.totalorder %s26, 0
      %p131 = por %p129, %p130
      %p132 = scmp.ne.s32.totalorder %s120, %s121
      %p133 = scmp.eq.s32.totalorder %s27, 1
      %p134 = por %p132, %p133
      %p136 = scmp.ne.s32.totalorder %s121, %s135
      %p137 = scmp.eq.s32.totalorder %s27, 0
      %p138 = por %p136, %p137
      %s140 = sadd.s32 %s139, 1
      %p143 = scmp.eq.s32.totalorder %s21, 1
      %p144 = scmp.ne.s32.totalorder %s139, %s141
      %p145 = scmp.eq.s32.totalorder %s21, 0
      %p146 = por %p144, %p145
      %p147 = scmp.ne.s32.totalorder %s139, %s141
      %p148 = scmp.eq.s32.totalorder %s26, 1
      %p149 = por %p147, %p148
      %p150 = scmp.ne.s32.totalorder %s141, %s142
      %p151 = scmp.eq.s32.totalorder %s26, 0
      %p152 = por %p150, %p151
      %p153 = scmp.ne.s32.totalorder %s141, %s142
      %p154 = scmp.eq.s32.totalorder %s27, 1
      %p155 = por %p153, %p154
      %p157 = scmp.ne.s32.totalorder %s142, %s156
      %p158 = scmp.eq.s32.totalorder %s27, 0
      %p159 = por %p157, %p158
      %s161 = sadd.s32 %s160, 1
      %p164 = scmp.eq.s32.totalorder %s21, 1
      %p165 = scmp.ne.s32.totalorder %s160, %s162
      %p166 = scmp.eq.s32.totalorder %s21, 0
      %p167 = por %p165, %p166
      %p168 = scmp.ne.s32.totalorder %s160, %s162
      %p169 = scmp.eq.s32.totalorder %s26, 1
      %p170 = por %p168, %p169
      %p171 = scmp.ne.s32.totalorder %s162, %s163
      %p172 = scmp.eq.s32.totalorder %s26, 0
      %p173 = por %p171, %p172
      %p174 = scmp.ne.s32.totalorder %s162, %s163
      %p175 = scmp.eq.s32.totalorder %s27, 1
      %p176 = por %p174, %p175
      %p178 = scmp.ne.s32.totalorder %s163, %s177
      %p179 = scmp.eq.s32.totalorder %s27, 0
      %p180 = por %p178, %p179
      %s181 = ssub.s32 %s21, %s28
      %p182 = scmp.eq.s32.totalorder %s181, 0
      %s184 = sadd.s32 %s183, 1
      %s185 = scalar_select %p182, %s183, %s184
      %p188 = pneg %p182
      %p189 = scmp.eq.s32.totalorder %s21, 1
      %p190 = por %p188, %p189
      %p191 = scmp.ne.s32.totalorder %s183, %s186
      %p192 = scmp.eq.s32.totalorder %s21, 0
      %p193 = por %p191, %p192
      %p194 = scmp.ne.s32.totalorder %s183, %s186
      %p195 = scmp.eq.s32.totalorder %s26, 1
      %p196 = por %p194, %p195
      %p197 = scmp.ne.s32.totalorder %s186, %s187
      %p198 = scmp.eq.s32.totalorder %s26, 0
      %p199 = por %p197, %p198
      %p200 = scmp.ne.s32.totalorder %s186, %s187
      %p201 = scmp.eq.s32.totalorder %s27, 1
      %p202 = por %p200, %p201
      %p204 = scmp.ne.s32.totalorder %s187, %s203
      %p205 = scmp.eq.s32.totalorder %s27, 0
      %p206 = por %p204, %p205
      %p207 = scmp.le.s32.totalorder 1, %s21
      %p208 = scmp.lt.s32.totalorder %s21, 3
      %p209 = pnand %p207, %p208
      %p210 = pneg %p209
      // Predicated region
      $region9: #{tpu_custom_call.1} parent=5 // pred_check
        _
      $region10: #{tpu_custom_call.1} parent=5 // pred_check_branch
        %212 = sbr.rel (%p209) target = $region12
      $region11: #{tpu_custom_call.1} parent=5 // pred_region
        %s213 = ssub.s32 %s21, 1
        // Predicated region
        $region13: #{tpu_custom_call.1} parent=11 // pred_check
          %p214 = pneg %p68
        $region14: #{tpu_custom_call.1} parent=11 // pred_check_branch
          %216 = sbr.rel (%p214) target = $region16
        $region15: #{tpu_custom_call.1} parent=11 // pred_region
          _
        $region16: #{tpu_custom_call.1} parent=11 // pred_fallthru
          _
        // Predicated region
        $region17: #{tpu_custom_call.1} parent=11 // pred_check
          %p217 = pneg %p89
        $region18: #{tpu_custom_call.1} parent=11 // pred_check_branch
          %219 = sbr.rel (%p217) target = $region20
        $region19: #{tpu_custom_call.1} parent=11 // pred_region
          _
        $region20: #{tpu_custom_call.1} parent=11 // pred_fallthru
          _
        // Predicated region
        $region21: #{tpu_custom_call.1} parent=11 // pred_check
          %p220 = pneg %p110
        $region22: #{tpu_custom_call.1} parent=11 // pred_check_branch
          %222 = sbr.rel (%p220) target = $region24
        $region23: #{tpu_custom_call.1} parent=11 // pred_region
          _
        $region24: #{tpu_custom_call.1} parent=11 // pred_fallthru
          _
        // Predicated region
        $region25: #{tpu_custom_call.1} parent=11 // pred_check
          %p223 = pneg %p131
        $region26: #{tpu_custom_call.1} parent=11 // pred_check_branch
          %225 = sbr.rel (%p223) target = $region28
        $region27: #{tpu_custom_call.1} parent=11 // pred_region
          _
        $region28: #{tpu_custom_call.1} parent=11 // pred_fallthru
          _
        // Predicated region
        $region29: #{tpu_custom_call.1} parent=11 // pred_check
          %p226 = pneg %p152
        $region30: #{tpu_custom_call.1} parent=11 // pred_check_branch
          %228 = sbr.rel (%p226) target = $region32
        $region31: #{tpu_custom_call.1} parent=11 // pred_region
          %s230 = ssub.s32 16384, 16384
          %231 = vsyncadd [#allocation7], %s230
          %s232 = sshll.u32 [#allocation6], 4
          %s233 = int_to_ptr.vmem [resolvable:$true] %s232
          %238 = dma.hbm_to_vmem [thread:$0]  %s5, 16384, %s233, [#allocation7], 256, 256, 16
        $region32: #{tpu_custom_call.1} parent=11 // pred_fallthru
          _
        // Predicated region
        $region33: #{tpu_custom_call.1} parent=11 // pred_check
          %p239 = pneg %p173
        $region34: #{tpu_custom_call.1} parent=11 // pred_check_branch
          %241 = sbr.rel (%p239) target = $region36
        $region35: #{tpu_custom_call.1} parent=11 // pred_region
          _
        $region36: #{tpu_custom_call.1} parent=11 // pred_fallthru
          _
      $region12: #{tpu_custom_call.1} parent=5 // pred_fallthru
        _
      %p242 = scmp.lt.s32.totalorder %s21, 2
      // Predicated region
      $region37: #{tpu_custom_call.1} parent=5 // pred_check
        %p243 = pneg %p242
      $region38: #{tpu_custom_call.1} parent=5 // pred_check_branch
        %245 = sbr.rel (%p243) target = $region40
      $region39: #{tpu_custom_call.1} parent=5 // pred_region
        // Predicated region
        $region41: #{tpu_custom_call.1} parent=39 // pred_check
          %p246 = pneg %p41
        $region42: #{tpu_custom_call.1} parent=39 // pred_check_branch
          %248 = sbr.rel (%p246) target = $region44
        $region43: #{tpu_custom_call.1} parent=39 // pred_region
          %s249 = sand.u32 %s31, 1
          %s250 = scalar_lea.sflag [#allocation4], %s249
          %s251 = sand.u32 %s31, 1
          %s252 = smul.addr %s251, 128
          %s253 = scalar_lea.vmem [#allocation3], %s252
          %s254 = smul.u32 2, %s21
          %s256 = ssub.s32 2048, 2048
          %257 = vsyncadd %s250, %s256
          %s258 = smul.addr %s254, 8
          %s259 = smul.addr %s258, 128
          %s260 = scalar_lea.hbm %s0, %s259
          %s261 = sshll.u32 %s253, 4
          %s262 = int_to_ptr.vmem [resolvable:$true] %s261
          %267 = dma.hbm_to_vmem [thread:$0]  %s260, 2048, %s262, %s250, 256, 256, 16
        $region44: #{tpu_custom_call.1} parent=39 // pred_fallthru
          _
      $region40: #{tpu_custom_call.1} parent=5 // pred_fallthru
        _
      %p268 = scmp.le.s32.totalorder 1, %s21
      %p269 = scmp.lt.s32.totalorder %s21, 3
      %p270 = pnand %p268, %p269
      %p271 = pneg %p270
      // Predicated region
      $region45: #{tpu_custom_call.1} parent=5 // pred_check
        _
      $region46: #{tpu_custom_call.1} parent=5 // pred_check_branch
        %273 = sbr.rel (%p270) target = $region48
      $region47: #{tpu_custom_call.1} parent=5 // pred_region
        %s274 = ssub.s32 %s21, 1
        %s275 = sand.u32 %s34, 1
        %s276 = scalar_lea.sflag [#allocation4], %s275
        %s277 = sand.u32 %s34, 1
        %s278 = smul.addr %s277, 128
        %s279 = scalar_lea.vmem [#allocation3], %s278
        // Predicated region
        $region49: #{tpu_custom_call.1} parent=47 // pred_check
          %p280 = pneg %p47
        $region50: #{tpu_custom_call.1} parent=47 // pred_check_branch
          %282 = sbr.rel (%p280) target = $region52
        $region51: #{tpu_custom_call.1} parent=47 // pred_region
          %283 = dma.done %s276, 2048
        $region52: #{tpu_custom_call.1} parent=47 // pred_fallthru
          _
        // Predicated region
        $region53: #{tpu_custom_call.1} parent=47 // pred_check
          %p284 = pneg %p152
        $region54: #{tpu_custom_call.1} parent=47 // pred_check_branch
          %286 = sbr.rel (%p284) target = $region56
        $region55: #{tpu_custom_call.1} parent=47 // pred_region
          %287 = dma.done [#allocation7], 16384
        $region56: #{tpu_custom_call.1} parent=47 // pred_fallthru
          _
        %s288 = sand.u32 %s34, 1
        %s289 = scalar_lea.sflag [#allocation4], %s288
        %s290 = sand.u32 %s34, 1
        %s291 = smul.addr %s290, 128
        %s292 = scalar_lea.vmem [#allocation3], %s291
        %p293 = pneg %p47
        %p294 = pneg %p44
        %p295 = pneg %p68
        %p296 = pneg %p65
        %p297 = pneg %p89
        %p298 = pneg %p86
        %p299 = pneg %p110
        %p300 = pneg %p107
        %p301 = pneg %p131
        %p302 = pneg %p128
        %p303 = pneg %p152
        %p304 = pneg %p149
        %p305 = pneg %p173
        %p306 = pneg %p170
        %p307 = pneg %p199
        %p308 = pneg %p196
        %s309 = sand.u32 %s186, 1
        %s310 = scalar_lea.sflag [#allocation5], %s309
        %s311 = sand.u32 %s186, 1
        %s312 = smul.addr %s311, 128
        %s313 = scalar_lea.vmem [#allocation8], %s312
        %s314 = smul.u32 2, %s26
        %s315 = smul.u32 2, %s26
        %v316 = vld [vmem:[%s279] sm:$0xff]
        %v317 = vld [vmem:[%s279 + $0x8] sm:$0xff]
        %v318 = vld [vmem:[%s279 + $0x10] sm:$0xff]
        %v319 = vld [vmem:[%s279 + $0x18] sm:$0xff]
        %v320 = vld [vmem:[%s279 + $0x20] sm:$0xff]
        %v321 = vld [vmem:[%s279 + $0x28] sm:$0xff]
        %v322 = vld [vmem:[%s279 + $0x30] sm:$0xff]
        %v323 = vld [vmem:[%s279 + $0x38] sm:$0xff]
        %v324 = vld [vmem:[%s279 + $0x40] sm:$0xff]
        %v325 = vld [vmem:[%s279 + $0x48] sm:$0xff]
        %v326 = vld [vmem:[%s279 + $0x50] sm:$0xff]
        %v327 = vld [vmem:[%s279 + $0x58] sm:$0xff]
        %v328 = vld [vmem:[%s279 + $0x60] sm:$0xff]
        %v329 = vld [vmem:[%s279 + $0x68] sm:$0xff]
        %v330 = vld [vmem:[%s279 + $0x70] sm:$0xff]
        %v331 = vld [vmem:[%s279 + $0x78] sm:$0xff]
        %v332 = vadd.f32 %v316, %v317
        %333 = vadd.xlane.f32.xlu0 %v332
        %v334 = vpop.xlane.xlu0 %333
        %v335 = vadd.f32 %v318, %v319
        %336 = vadd.xlane.f32.xlu0 %v335
        %v337 = vpop.xlane.xlu0 %336
        %v338 = vadd.f32 %v320, %v321
        %339 = vadd.xlane.f32.xlu0 %v338
        %v340 = vpop.xlane.xlu0 %339
        %v341 = vadd.f32 %v322, %v323
        %342 = vadd.xlane.f32.xlu0 %v341
        %v343 = vpop.xlane.xlu0 %342
        %v344 = vadd.f32 %v324, %v325
        %345 = vadd.xlane.f32.xlu0 %v344
        %v346 = vpop.xlane.xlu0 %345
        %v347 = vadd.f32 %v326, %v327
        %348 = vadd.xlane.f32.xlu0 %v347
        %v349 = vpop.xlane.xlu0 %348
        %v350 = vadd.f32 %v328, %v329
        %351 = vadd.xlane.f32.xlu0 %v350
        %v352 = vpop.xlane.xlu0 %351
        %v353 = vadd.f32 %v330, %v331
        %354 = vadd.xlane.f32.xlu0 %v353
        %v355 = vpop.xlane.xlu0 %354
        %v356 = vmul.f32 %v334, 0.00390625
        %v357 = vmul.f32 %v337, 0.00390625
        %v358 = vmul.f32 %v340, 0.00390625
        %v359 = vmul.f32 %v343, 0.00390625
        %v360 = vmul.f32 %v346, 0.00390625
        %v361 = vmul.f32 %v349, 0.00390625
        %v362 = vmul.f32 %v352, 0.00390625
        %v363 = vmul.f32 %v355, 0.00390625
        %v364 = vmax.f32 %v316, %v317
        %365 = vmax.xlane.f32.xlu0 %v364
        %v366 = vpop.xlane.xlu0 %365
        %v367 = vmax.f32 %v318, %v319
        %368 = vmax.xlane.f32.xlu0 %v367
        %v369 = vpop.xlane.xlu0 %368
        %v370 = vmax.f32 %v320, %v321
        %371 = vmax.xlane.f32.xlu0 %v370
        %v372 = vpop.xlane.xlu0 %371
        %v373 = vmax.f32 %v322, %v323
        %374 = vmax.xlane.f32.xlu0 %v373
        %v375 = vpop.xlane.xlu0 %374
        %v376 = vmax.f32 %v324, %v325
        %377 = vmax.xlane.f32.xlu0 %v376
        %v378 = vpop.xlane.xlu0 %377
        %v379 = vmax.f32 %v326, %v327
        %380 = vmax.xlane.f32.xlu0 %v379
        %v381 = vpop.xlane.xlu0 %380
        %v382 = vmax.f32 %v328, %v329
        %383 = vmax.xlane.f32.xlu0 %v382
        %v384 = vpop.xlane.xlu0 %383
        %v385 = vmax.f32 %v330, %v331
        %386 = vmax.xlane.f32.xlu0 %v385
        %v387 = vpop.xlane.xlu0 %386
        %v388 = vld [vmem:[%s1] sm:$0xff]
        %v389 = vld [vmem:[%s1 + $0x8] sm:$0xff]
        %v390 = vld [vmem:[%s1 + $0x10] sm:$0xff]
        %v391 = vld [vmem:[%s1 + $0x18] sm:$0xff]
        %v392 = vld [vmem:[%s2] sm:$0x1]
        %v394 = vlaneseq
        %v395 = vshrl.u32 %v394, 7
        %v396 = vsub.s32 0, %v395
        %v397 = vrot.slane %v392, %v396
        %v407 = vlaneseq
        %v408 = vand.u32 %v407, 127
        %v409 = vlaneseq
        %v410 = vshrl.u32 %v409, 7
        %v411 = vsub.s32 %v408, %v410
        %v412 = vrot.slane %v356, %v411
        %v413 = vadd.s32 %v408, 4294967288
        %v414 = vlaneseq
        %v415 = vshrl.u32 %v414, 7
        %v416 = vsub.s32 %v413, %v415
        %v417 = vrot.slane %v357, %v416
        %vm418 = vcmask 130112
        %v419 = vsel %vm418, %v417, %v412
        %v420 = vadd.s32 %v408, 4294967280
        %v421 = vlaneseq
        %v422 = vshrl.u32 %v421, 7
        %v423 = vsub.s32 %v420, %v422
        %v424 = vrot.slane %v358, %v423
        %vm425 = vcmask 195712
        %v426 = vsel %vm425, %v424, %v419
        %v427 = vadd.s32 %v408, 4294967272
        %v428 = vlaneseq
        %v429 = vshrl.u32 %v428, 7
        %v430 = vsub.s32 %v427, %v429
        %v431 = vrot.slane %v359, %v430
        %vm432 = vcmask 261312
        %v433 = vsel %vm432, %v431, %v426
        %v434 = vlaneseq
        %v435 = vshrl.u32 %v434, 7
        %v436 = vsub.s32 %v408, %v435
        %v437 = vrot.slane %v360, %v436
        %v438 = vlaneseq
        %v439 = vshrl.u32 %v438, 7
        %v440 = vsub.s32 %v413, %v439
        %v441 = vrot.slane %v361, %v440
        %v442 = vsel %vm418, %v441, %v437
        %v443 = vlaneseq
        %v444 = vshrl.u32 %v443, 7
        %v445 = vsub.s32 %v420, %v444
        %v446 = vrot.slane %v362, %v445
        %v447 = vsel %vm425, %v446, %v442
        %v448 = vlaneseq
        %v449 = vshrl.u32 %v448, 7
        %v450 = vsub.s32 %v427, %v449
        %v451 = vrot.slane %v363, %v450
        %v452 = vsel %vm432, %v451, %v447
        %vm453 = vcmask 1041409
        %v454 = vsel %vm453, %v452, %v433
        %vm455 = vcmask 261120
        %v456 = vsel %vm455, %v454, 0
        %458 = vmatprep.subr.mxu0 0.0
        %459 = vmatpush1.msra.mxu0 %v388
        %460 = vmatprep.subr.mxu0 0.0
        %461 = vmatpush1.msra.mxu0 %v389
        %462 = vmatprep.subr.mxu0 0.0
        %463 = vmatpush1.msra.mxu0 %v390
        %464 = vmatprep.subr.mxu0 0.0
        %465 = vmatpush1.msra.mxu0 %v391
        %466 = vmatprep.subr.mxu0 0.0
        %467 = vmatpush1.msra.mxu0 0.0
        %468 = vmatprep.subr.mxu0 0.0
        %469 = vmatpush1.msra.mxu0 0.0
        %470 = vmatprep.subr.mxu0 0.0
        %471 = vmatpush1.msra.mxu0 0.0
        %472 = vmatprep.subr.mxu0 0.0
        %473 = vmatpush1.msra.mxu0 0.0
        %474 = vmatprep.subr.mxu0 0.0
        %475 = vmatpush1.msra.mxu0 0.0
        %476 = vmatprep.subr.mxu0 0.0
        %477 = vmatpush1.msra.mxu0 0.0
        %478 = vmatprep.subr.mxu0 0.0
        %479 = vmatpush1.msra.mxu0 0.0
        %480 = vmatprep.subr.mxu0 0.0
        %481 = vmatpush1.msra.mxu0 0.0
        %482 = vmatprep.subr.mxu0 0.0
        %483 = vmatpush1.msra.mxu0 0.0
        %484 = vmatprep.subr.mxu0 0.0
        %485 = vmatpush1.msra.mxu0 0.0
        %486 = vmatprep.subr.mxu0 0.0
        %487 = vmatpush1.msra.mxu0 0.0
        %488 = vmatprep.subr.mxu0 0.0
        %489 = vmatpush1.msra.mxu0 0.0
        %490 = vmatprep.subr.mxu0 0.0
        %491 = vmatpush1.msra.mxu0 0.0
        %492 = vmatprep.subr.mxu0 0.0
        %493 = vmatpush1.msra.mxu0 0.0
        %494 = vmatprep.subr.mxu0 0.0
        %495 = vmatpush1.msra.mxu0 0.0
        %496 = vmatprep.subr.mxu0 0.0
        %497 = vmatpush1.msra.mxu0 0.0
        %498 = vmatprep.subr.mxu0 0.0
        %499 = vmatpush1.msra.mxu0 0.0
        %500 = vmatprep.subr.mxu0 0.0
        %501 = vmatpush1.msra.mxu0 0.0
        %502 = vmatprep.subr.mxu0 0.0
        %503 = vmatpush1.msra.mxu0 0.0
        %504 = vmatprep.subr.mxu0 0.0
        %505 = vmatpush1.msra.mxu0 0.0
        %506 = vmatprep.subr.mxu0 0.0
        %507 = vmatpush1.msra.mxu0 0.0
        %508 = vmatprep.subr.mxu0 0.0
        %509 = vmatpush1.msra.mxu0 0.0
        %510 = vmatprep.subr.mxu0 0.0
        %511 = vmatpush1.msra.mxu0 0.0
        %512 = vmatprep.subr.mxu0 0.0
        %513 = vmatpush1.msra.mxu0 0.0
        %514 = vmatprep.subr.mxu0 0.0
        %515 = vmatpush1.msra.mxu0 0.0
        %516 = vmatprep.subr.mxu0 0.0
        %517 = vmatpush1.msra.mxu0 0.0
        %518 = vmatprep.subr.mxu0 0.0
        %519 = vmatpush1.msra.mxu0 0.0
        %520 = vmatprep.subr.mxu0 0.0
        %521 = vmatpush1.msra.mxu0 0.0
        %522 = vmatprep.mubr.f32.mxu0 0.0
        %523 = vmatmul.mubr.f32.gmra.mrb[0].mxu0 %v456
        %v524 = vpop.f32.mrb[0].mxu0
        %v525 = vadd.f32 %v397, %v524
        %v526 = vpop.f32.mrb[0].mxu0
        %527 = vdwg.mxu0
        %v528 = vmax.f32 %v525, 0.0
        %v537 = vlaneseq
        %v538 = vshrl.u32 %v537, 7
        %v539 = vsub.s32 %v408, %v538
        %v540 = vrot.slane %v366, %v539
        %v541 = vlaneseq
        %v542 = vshrl.u32 %v541, 7
        %v543 = vsub.s32 %v413, %v542
        %v544 = vrot.slane %v369, %v543
        %v545 = vsel %vm418, %v544, %v540
        %v546 = vlaneseq
        %v547 = vshrl.u32 %v546, 7
        %v548 = vsub.s32 %v420, %v547
        %v549 = vrot.slane %v372, %v548
        %v550 = vsel %vm425, %v549, %v545
        %v551 = vlaneseq
        %v552 = vshrl.u32 %v551, 7
        %v553 = vsub.s32 %v427, %v552
        %v554 = vrot.slane %v375, %v553
        %v555 = vsel %vm432, %v554, %v550
        %v556 = vlaneseq
        %v557 = vshrl.u32 %v556, 7
        %v558 = vsub.s32 %v408, %v557
        %v559 = vrot.slane %v378, %v558
        %v560 = vlaneseq
        %v561 = vshrl.u32 %v560, 7
        %v562 = vsub.s32 %v413, %v561
        %v563 = vrot.slane %v381, %v562
        %v564 = vsel %vm418, %v563, %v559
        %v565 = vlaneseq
        %v566 = vshrl.u32 %v565, 7
        %v567 = vsub.s32 %v420, %v566
        %v568 = vrot.slane %v384, %v567
        %v569 = vsel %vm425, %v568, %v564
        %v570 = vlaneseq
        %v571 = vshrl.u32 %v570, 7
        %v572 = vsub.s32 %v427, %v571
        %v573 = vrot.slane %v387, %v572
        %v574 = vsel %vm432, %v573, %v569
        %v575 = vsel %vm453, %v574, %v555
        %v576 = vsel %vm455, %v575, 0
        %578 = vmatprep.subr.mxu0 0.0
        %579 = vmatpush1.msra.mxu0 %v388
        %580 = vmatprep.subr.mxu0 0.0
        %581 = vmatpush1.msra.mxu0 %v389
        %582 = vmatprep.subr.mxu0 0.0
        %583 = vmatpush1.msra.mxu0 %v390
        %584 = vmatprep.subr.mxu0 0.0
        %585 = vmatpush1.msra.mxu0 %v391
        %586 = vmatprep.subr.mxu0 0.0
        %587 = vmatpush1.msra.mxu0 0.0
        %588 = vmatprep.subr.mxu0 0.0
        %589 = vmatpush1.msra.mxu0 0.0
        %590 = vmatprep.subr.mxu0 0.0
        %591 = vmatpush1.msra.mxu0 0.0
        %592 = vmatprep.subr.mxu0 0.0
        %593 = vmatpush1.msra.mxu0 0.0
        %594 = vmatprep.subr.mxu0 0.0
        %595 = vmatpush1.msra.mxu0 0.0
        %596 = vmatprep.subr.mxu0 0.0
        %597 = vmatpush1.msra.mxu0 0.0
        %598 = vmatprep.subr.mxu0 0.0
        %599 = vmatpush1.msra.mxu0 0.0
        %600 = vmatprep.subr.mxu0 0.0
        %601 = vmatpush1.msra.mxu0 0.0
        %602 = vmatprep.subr.mxu0 0.0
        %603 = vmatpush1.msra.mxu0 0.0
        %604 = vmatprep.subr.mxu0 0.0
        %605 = vmatpush1.msra.mxu0 0.0
        %606 = vmatprep.subr.mxu0 0.0
        %607 = vmatpush1.msra.mxu0 0.0
        %608 = vmatprep.subr.mxu0 0.0
        %609 = vmatpush1.msra.mxu0 0.0
        %610 = vmatprep.subr.mxu0 0.0
        %611 = vmatpush1.msra.mxu0 0.0
        %612 = vmatprep.subr.mxu0 0.0
        %613 = vmatpush1.msra.mxu0 0.0
        %614 = vmatprep.subr.mxu0 0.0
        %615 = vmatpush1.msra.mxu0 0.0
        %616 = vmatprep.subr.mxu0 0.0
        %617 = vmatpush1.msra.mxu0 0.0
        %618 = vmatprep.subr.mxu0 0.0
        %619 = vmatpush1.msra.mxu0 0.0
        %620 = vmatprep.subr.mxu0 0.0
        %621 = vmatpush1.msra.mxu0 0.0
        %622 = vmatprep.subr.mxu0 0.0
        %623 = vmatpush1.msra.mxu0 0.0
        %624 = vmatprep.subr.mxu0 0.0
        %625 = vmatpush1.msra.mxu0 0.0
        %626 = vmatprep.subr.mxu0 0.0
        %627 = vmatpush1.msra.mxu0 0.0
        %628 = vmatprep.subr.mxu0 0.0
        %629 = vmatpush1.msra.mxu0 0.0
        %630 = vmatprep.subr.mxu0 0.0
        %631 = vmatpush1.msra.mxu0 0.0
        %632 = vmatprep.subr.mxu0 0.0
        %633 = vmatpush1.msra.mxu0 0.0
        %634 = vmatprep.subr.mxu0 0.0
        %635 = vmatpush1.msra.mxu0 0.0
        %636 = vmatprep.subr.mxu0 0.0
        %637 = vmatpush1.msra.mxu0 0.0
        %638 = vmatprep.subr.mxu0 0.0
        %639 = vmatpush1.msra.mxu0 0.0
        %640 = vmatprep.subr.mxu0 0.0
        %641 = vmatpush1.msra.mxu0 0.0
        %642 = vmatprep.mubr.f32.mxu0 0.0
        %643 = vmatmul.mubr.f32.gmra.mrb[0].mxu0 %v576
        %v644 = vpop.f32.mrb[0].mxu0
        %v645 = vadd.f32 %v397, %v644
        %v646 = vpop.f32.mrb[0].mxu0
        %647 = vdwg.mxu0
        %v648 = vmax.f32 %v645, 0.0
        %v649 = vadd.f32 %v528, %v648
        %v650 = vld [vmem:[%s3] sm:$0x3]
        %v651 = vld [vmem:[%s4] sm:$0x1]
        %v652 = vmul.f32 %v651, 2.0
        %v654 = vlaneseq
        %v655 = vshrl.u32 %v654, 7
        %v656 = vsub.s32 0, %v655
        %v657 = vrot.slane %v652, %v656
        %vm659 = vcmask 15360
        %v661 = vsel %vm659, %v649, 0
        %vm663 = vcmask 1041408
        %v665 = vsel %vm663, %v650, 0
        %667 = vmatprep.subr.mxu0 0.0
        %668 = vmatpush1.msra.mxu0 %v665
        %669 = vmatprep.subr.mxu0 0.0
        %670 = vmatpush1.msra.mxu0 0.0
        %671 = vmatprep.subr.mxu0 0.0
        %672 = vmatpush1.msra.mxu0 0.0
        %673 = vmatprep.subr.mxu0 0.0
        %674 = vmatpush1.msra.mxu0 0.0
        %675 = vmatprep.subr.mxu0 0.0
        %676 = vmatpush1.msra.mxu0 0.0
        %677 = vmatprep.subr.mxu0 0.0
        %678 = vmatpush1.msra.mxu0 0.0
        %679 = vmatprep.subr.mxu0 0.0
        %680 = vmatpush1.msra.mxu0 0.0
        %681 = vmatprep.subr.mxu0 0.0
        %682 = vmatpush1.msra.mxu0 0.0
        %683 = vmatprep.subr.mxu0 0.0
        %684 = vmatpush1.msra.mxu0 0.0
        %685 = vmatprep.subr.mxu0 0.0
        %686 = vmatpush1.msra.mxu0 0.0
        %687 = vmatprep.subr.mxu0 0.0
        %688 = vmatpush1.msra.mxu0 0.0
        %689 = vmatprep.subr.mxu0 0.0
        %690 = vmatpush1.msra.mxu0 0.0
        %691 = vmatprep.subr.mxu0 0.0
        %692 = vmatpush1.msra.mxu0 0.0
        %693 = vmatprep.subr.mxu0 0.0
        %694 = vmatpush1.msra.mxu0 0.0
        %695 = vmatprep.subr.mxu0 0.0
        %696 = vmatpush1.msra.mxu0 0.0
        %697 = vmatprep.subr.mxu0 0.0
        %698 = vmatpush1.msra.mxu0 0.0
        %699 = vmatprep.subr.mxu0 0.0
        %700 = vmatpush1.msra.mxu0 0.0
        %701 = vmatprep.subr.mxu0 0.0
        %702 = vmatpush1.msra.mxu0 0.0
        %703 = vmatprep.subr.mxu0 0.0
        %704 = vmatpush1.msra.mxu0 0.0
        %705 = vmatprep.subr.mxu0 0.0
        %706 = vmatpush1.msra.mxu0 0.0
        %707 = vmatprep.subr.mxu0 0.0
        %708 = vmatpush1.msra.mxu0 0.0
        %709 = vmatprep.subr.mxu0 0.0
        %710 = vmatpush1.msra.mxu0 0.0
        %711 = vmatprep.subr.mxu0 0.0
        %712 = vmatpush1.msra.mxu0 0.0
        %713 = vmatprep.subr.mxu0 0.0
        %714 = vmatpush1.msra.mxu0 0.0
        %715 = vmatprep.subr.mxu0 0.0
        %716 = vmatpush1.msra.mxu0 0.0
        %717 = vmatprep.subr.mxu0 0.0
        %718 = vmatpush1.msra.mxu0 0.0
        %719 = vmatprep.subr.mxu0 0.0
        %720 = vmatpush1.msra.mxu0 0.0
        %721 = vmatprep.subr.mxu0 0.0
        %722 = vmatpush1.msra.mxu0 0.0
        %723 = vmatprep.subr.mxu0 0.0
        %724 = vmatpush1.msra.mxu0 0.0
        %725 = vmatprep.subr.mxu0 0.0
        %726 = vmatpush1.msra.mxu0 0.0
        %727 = vmatprep.subr.mxu0 0.0
        %728 = vmatpush1.msra.mxu0 0.0
        %729 = vmatprep.subr.mxu0 0.0
        %730 = vmatpush1.msra.mxu0 0.0
        %731 = vmatprep.mubr.f32.mxu0 0.0
        %732 = vmatmul.mubr.f32.gmra.mrb[0].mxu0 %v661
        %v733 = vpop.f32.mrb[0].mxu0
        %v734 = vadd.f32 %v657, %v733
        %v735 = vpop.f32.mrb[0].mxu0
        %736 = vdwg.mxu0
        %v737 = vxor.u32 %v734, 2147483648
        %v738 = vmul.f32 %v737, 1.442695
        %v739 = vpow.pop %v738
        %v740 = vadd.f32 %v739, 1.0
        %v741 = vrcp.pop %v740
        %v742 = vmul.f32 1.0, %v741
        %v743 = vlaneseq
        %v744 = vshrl.u32 %v743, 7
        %v745 = vsub.s32 0, %v744
        %v746 = vrot.slane %v742, %v745
        %748 = vbcast.lane.b32.xlu0 %v746, 256
        %v749 = vpop.permute.xlu0 %748
        %s751 = sor.u32 256, 8
        %752 = vbcast.lane.b32.xlu0 %v746, %s751
        %v753 = vpop.permute.xlu0 %752
        %s755 = sor.u32 256, 16
        %756 = vbcast.lane.b32.xlu0 %v746, %s755
        %v757 = vpop.permute.xlu0 %756
        %s759 = sor.u32 256, 24
        %760 = vbcast.lane.b32.xlu0 %v746, %s759
        %v761 = vpop.permute.xlu0 %760
        %v762 = vlaneseq
        %v763 = vshrl.u32 %v762, 7
        %v764 = vsub.s32 1, %v763
        %v765 = vrot.slane %v742, %v764
        %767 = vbcast.lane.b32.xlu0 %v765, 256
        %v768 = vpop.permute.xlu0 %767
        %s770 = sor.u32 256, 8
        %771 = vbcast.lane.b32.xlu0 %v765, %s770
        %v772 = vpop.permute.xlu0 %771
        %s774 = sor.u32 256, 16
        %775 = vbcast.lane.b32.xlu0 %v765, %s774
        %v776 = vpop.permute.xlu0 %775
        %s778 = sor.u32 256, 24
        %779 = vbcast.lane.b32.xlu0 %v765, %s778
        %v780 = vpop.permute.xlu0 %779
        %v781 = vmul.f32 %v316, %v749
        %v782 = vmul.f32 %v317, %v749
        %v783 = vmul.f32 %v318, %v753
        %v784 = vmul.f32 %v319, %v753
        %v785 = vmul.f32 %v320, %v757
        %v786 = vmul.f32 %v321, %v757
        %v787 = vmul.f32 %v322, %v761
        %v788 = vmul.f32 %v323, %v761
        %v789 = vmul.f32 %v324, %v768
        %v790 = vmul.f32 %v325, %v768
        %v791 = vmul.f32 %v326, %v772
        %v792 = vmul.f32 %v327, %v772
        %v793 = vmul.f32 %v328, %v776
        %v794 = vmul.f32 %v329, %v776
        %v795 = vmul.f32 %v330, %v780
        %v796 = vmul.f32 %v331, %v780
        %v797 = vmax.f32 %v781, %v783
        %v798 = vmax.f32 %v797, %v785
        %v799 = vmax.f32 %v798, %v787
        %v800 = vrot.slane %v799, 4
        %v801 = vmax.f32 %v799, %v800
        %v802 = vrot.slane %v801, 2
        %v803 = vmax.f32 %v801, %v802
        %v804 = vrot.slane %v803, 1
        %v805 = vmax.f32 %v803, %v804
        %v806 = vmax.f32 %v782, %v784
        %v807 = vmax.f32 %v806, %v786
        %v808 = vmax.f32 %v807, %v788
        %v809 = vrot.slane %v808, 4
        %v810 = vmax.f32 %v808, %v809
        %v811 = vrot.slane %v810, 2
        %v812 = vmax.f32 %v810, %v811
        %v813 = vrot.slane %v812, 1
        %v814 = vmax.f32 %v812, %v813
        %v815 = vmax.f32 %v789, %v791
        %v816 = vmax.f32 %v815, %v793
        %v817 = vmax.f32 %v816, %v795
        %v818 = vrot.slane %v817, 4
        %v819 = vmax.f32 %v817, %v818
        %v820 = vrot.slane %v819, 2
        %v821 = vmax.f32 %v819, %v820
        %v822 = vrot.slane %v821, 1
        %v823 = vmax.f32 %v821, %v822
        %v824 = vmax.f32 %v790, %v792
        %v825 = vmax.f32 %v824, %v794
        %v826 = vmax.f32 %v825, %v796
        %v827 = vrot.slane %v826, 4
        %v828 = vmax.f32 %v826, %v827
        %v829 = vrot.slane %v828, 2
        %v830 = vmax.f32 %v828, %v829
        %v831 = vrot.slane %v830, 1
        %v832 = vmax.f32 %v830, %v831
        %v833 = vadd.f32 %v781, %v783
        %v834 = vadd.f32 %v833, %v785
        %v835 = vadd.f32 %v834, %v787
        %v836 = vrot.slane %v835, 4
        %v837 = vadd.f32 %v835, %v836
        %v838 = vrot.slane %v837, 2
        %v839 = vadd.f32 %v837, %v838
        %v840 = vrot.slane %v839, 1
        %v841 = vadd.f32 %v839, %v840
        %v842 = vadd.f32 %v782, %v784
        %v843 = vadd.f32 %v842, %v786
        %v844 = vadd.f32 %v843, %v788
        %v845 = vrot.slane %v844, 4
        %v846 = vadd.f32 %v844, %v845
        %v847 = vrot.slane %v846, 2
        %v848 = vadd.f32 %v846, %v847
        %v849 = vrot.slane %v848, 1
        %v850 = vadd.f32 %v848, %v849
        %v851 = vadd.f32 %v789, %v791
        %v852 = vadd.f32 %v851, %v793
        %v853 = vadd.f32 %v852, %v795
        %v854 = vrot.slane %v853, 4
        %v855 = vadd.f32 %v853, %v854
        %v856 = vrot.slane %v855, 2
        %v857 = vadd.f32 %v855, %v856
        %v858 = vrot.slane %v857, 1
        %v859 = vadd.f32 %v857, %v858
        %v860 = vadd.f32 %v790, %v792
        %v861 = vadd.f32 %v860, %v794
        %v862 = vadd.f32 %v861, %v796
        %v863 = vrot.slane %v862, 4
        %v864 = vadd.f32 %v862, %v863
        %v865 = vrot.slane %v864, 2
        %v866 = vadd.f32 %v864, %v865
        %v867 = vrot.slane %v866, 1
        %v868 = vadd.f32 %v866, %v867
        %v869 = vmul.f32 %v841, 0.03125
        %v870 = vmul.f32 %v850, 0.03125
        %v871 = vmul.f32 %v859, 0.03125
        %v872 = vmul.f32 %v868, 0.03125
        %v877 = vsel %vm453, %v823, %v805
        %v878 = vsel %vm453, %v832, %v814
        %v885 = vsel %vm453, %v871, %v869
        %v886 = vsel %vm453, %v872, %v870
        %v889 = vld [vmem:[#allocation6] sm:$0xff]
        %v890 = vld [vmem:[#allocation6 + $0x8] sm:$0xff]
        %v891 = vld [vmem:[#allocation6 + $0x10] sm:$0xff]
        %v892 = vld [vmem:[#allocation6 + $0x18] sm:$0xff]
        %v893 = vld [vmem:[#allocation6 + $0x20] sm:$0xff]
        %v894 = vld [vmem:[#allocation6 + $0x28] sm:$0xff]
        %v895 = vld [vmem:[#allocation6 + $0x30] sm:$0xff]
        %v896 = vld [vmem:[#allocation6 + $0x38] sm:$0xff]
        %v897 = vld [vmem:[#allocation6 + $0x40] sm:$0xff]
        %v898 = vld [vmem:[#allocation6 + $0x48] sm:$0xff]
        %v899 = vld [vmem:[#allocation6 + $0x50] sm:$0xff]
        %v900 = vld [vmem:[#allocation6 + $0x58] sm:$0xff]
        %v901 = vld [vmem:[#allocation6 + $0x60] sm:$0xff]
        %v902 = vld [vmem:[#allocation6 + $0x68] sm:$0xff]
        %v903 = vld [vmem:[#allocation6 + $0x70] sm:$0xff]
        %v904 = vld [vmem:[#allocation6 + $0x78] sm:$0xff]
        %v905 = vld [vmem:[#allocation6 + $0x80] sm:$0xff]
        %v906 = vld [vmem:[#allocation6 + $0x88] sm:$0xff]
        %v907 = vld [vmem:[#allocation6 + $0x90] sm:$0xff]
        %v908 = vld [vmem:[#allocation6 + $0x98] sm:$0xff]
        %v909 = vld [vmem:[#allocation6 + $0xa0] sm:$0xff]
        %v910 = vld [vmem:[#allocation6 + $0xa8] sm:$0xff]
        %v911 = vld [vmem:[#allocation6 + $0xb0] sm:$0xff]
        %v912 = vld [vmem:[#allocation6 + $0xb8] sm:$0xff]
        %v913 = vld [vmem:[#allocation6 + $0xc0] sm:$0xff]
        %v914 = vld [vmem:[#allocation6 + $0xc8] sm:$0xff]
        %v915 = vld [vmem:[#allocation6 + $0xd0] sm:$0xff]
        %v916 = vld [vmem:[#allocation6 + $0xd8] sm:$0xff]
        %v917 = vld [vmem:[#allocation6 + $0xe0] sm:$0xff]
        %v918 = vld [vmem:[#allocation6 + $0xe8] sm:$0xff]
        %v919 = vld [vmem:[#allocation6 + $0xf0] sm:$0xff]
        %v920 = vld [vmem:[#allocation6 + $0xf8] sm:$0xff]
        %v921 = vld [vmem:[#allocation6 + $0x100] sm:$0xff]
        %v922 = vld [vmem:[#allocation6 + $0x108] sm:$0xff]
        %v923 = vld [vmem:[#allocation6 + $0x110] sm:$0xff]
        %v924 = vld [vmem:[#allocation6 + $0x118] sm:$0xff]
        %v925 = vld [vmem:[#allocation6 + $0x120] sm:$0xff]
        %v926 = vld [vmem:[#allocation6 + $0x128] sm:$0xff]
        %v927 = vld [vmem:[#allocation6 + $0x130] sm:$0xff]
        %v928 = vld [vmem:[#allocation6 + $0x138] sm:$0xff]
        %v929 = vld [vmem:[#allocation6 + $0x140] sm:$0xff]
        %v930 = vld [vmem:[#allocation6 + $0x148] sm:$0xff]
        %v931 = vld [vmem:[#allocation6 + $0x150] sm:$0xff]
        %v932 = vld [vmem:[#allocation6 + $0x158] sm:$0xff]
        %v933 = vld [vmem:[#allocation6 + $0x160] sm:$0xff]
        %v934 = vld [vmem:[#allocation6 + $0x168] sm:$0xff]
        %v935 = vld [vmem:[#allocation6 + $0x170] sm:$0xff]
        %v936 = vld [vmem:[#allocation6 + $0x178] sm:$0xff]
        %v937 = vld [vmem:[#allocation6 + $0x180] sm:$0xff]
        %v938 = vld [vmem:[#allocation6 + $0x188] sm:$0xff]
        %v939 = vld [vmem:[#allocation6 + $0x190] sm:$0xff]
        %v940 = vld [vmem:[#allocation6 + $0x198] sm:$0xff]
        %v941 = vld [vmem:[#allocation6 + $0x1a0] sm:$0xff]
        %v942 = vld [vmem:[#allocation6 + $0x1a8] sm:$0xff]
        %v943 = vld [vmem:[#allocation6 + $0x1b0] sm:$0xff]
        %v944 = vld [vmem:[#allocation6 + $0x1b8] sm:$0xff]
        %v945 = vld [vmem:[#allocation6 + $0x1c0] sm:$0xff]
        %v946 = vld [vmem:[#allocation6 + $0x1c8] sm:$0xff]
        %v947 = vld [vmem:[#allocation6 + $0x1d0] sm:$0xff]
        %v948 = vld [vmem:[#allocation6 + $0x1d8] sm:$0xff]
        %v949 = vld [vmem:[#allocation6 + $0x1e0] sm:$0xff]
        %v950 = vld [vmem:[#allocation6 + $0x1e8] sm:$0xff]
        %v951 = vld [vmem:[#allocation6 + $0x1f0] sm:$0xff]
        %v952 = vld [vmem:[#allocation6 + $0x1f8] sm:$0xff]
        %v953 = vld [vmem:[#allocation6 + $0x200] sm:$0xff]
        %v954 = vld [vmem:[#allocation6 + $0x208] sm:$0xff]
        %v955 = vld [vmem:[#allocation6 + $0x210] sm:$0xff]
        %v956 = vld [vmem:[#allocation6 + $0x218] sm:$0xff]
        %v957 = vld [vmem:[#allocation6 + $0x220] sm:$0xff]
        %v958 = vld [vmem:[#allocation6 + $0x228] sm:$0xff]
        %v959 = vld [vmem:[#allocation6 + $0x230] sm:$0xff]
        %v960 = vld [vmem:[#allocation6 + $0x238] sm:$0xff]
        %v961 = vld [vmem:[#allocation6 + $0x240] sm:$0xff]
        %v962 = vld [vmem:[#allocation6 + $0x248] sm:$0xff]
        %v963 = vld [vmem:[#allocation6 + $0x250] sm:$0xff]
        %v964 = vld [vmem:[#allocation6 + $0x258] sm:$0xff]
        %v965 = vld [vmem:[#allocation6 + $0x260] sm:$0xff]
        %v966 = vld [vmem:[#allocation6 + $0x268] sm:$0xff]
        %v967 = vld [vmem:[#allocation6 + $0x270] sm:$0xff]
        %v968 = vld [vmem:[#allocation6 + $0x278] sm:$0xff]
        %v969 = vld [vmem:[#allocation6 + $0x280] sm:$0xff]
        %v970 = vld [vmem:[#allocation6 + $0x288] sm:$0xff]
        %v971 = vld [vmem:[#allocation6 + $0x290] sm:$0xff]
        %v972 = vld [vmem:[#allocation6 + $0x298] sm:$0xff]
        %v973 = vld [vmem:[#allocation6 + $0x2a0] sm:$0xff]
        %v974 = vld [vmem:[#allocation6 + $0x2a8] sm:$0xff]
        %v975 = vld [vmem:[#allocation6 + $0x2b0] sm:$0xff]
        %v976 = vld [vmem:[#allocation6 + $0x2b8] sm:$0xff]
        %v977 = vld [vmem:[#allocation6 + $0x2c0] sm:$0xff]
        %v978 = vld [vmem:[#allocation6 + $0x2c8] sm:$0xff]
        %v979 = vld [vmem:[#allocation6 + $0x2d0] sm:$0xff]
        %v980 = vld [vmem:[#allocation6 + $0x2d8] sm:$0xff]
        %v981 = vld [vmem:[#allocation6 + $0x2e0] sm:$0xff]
        %v982 = vld [vmem:[#allocation6 + $0x2e8] sm:$0xff]
        %v983 = vld [vmem:[#allocation6 + $0x2f0] sm:$0xff]
        %v984 = vld [vmem:[#allocation6 + $0x2f8] sm:$0xff]
        %v985 = vld [vmem:[#allocation6 + $0x300] sm:$0xff]
        %v986 = vld [vmem:[#allocation6 + $0x308] sm:$0xff]
        %v987 = vld [vmem:[#allocation6 + $0x310] sm:$0xff]
        %v988 = vld [vmem:[#allocation6 + $0x318] sm:$0xff]
        %v989 = vld [vmem:[#allocation6 + $0x320] sm:$0xff]
        %v990 = vld [vmem:[#allocation6 + $0x328] sm:$0xff]
        %v991 = vld [vmem:[#allocation6 + $0x330] sm:$0xff]
        %v992 = vld [vmem:[#allocation6 + $0x338] sm:$0xff]
        %v993 = vld [vmem:[#allocation6 + $0x340] sm:$0xff]
        %v994 = vld [vmem:[#allocation6 + $0x348] sm:$0xff]
        %v995 = vld [vmem:[#allocation6 + $0x350] sm:$0xff]
        %v996 = vld [vmem:[#allocation6 + $0x358] sm:$0xff]
        %v997 = vld [vmem:[#allocation6 + $0x360] sm:$0xff]
        %v998 = vld [vmem:[#allocation6 + $0x368] sm:$0xff]
        %v999 = vld [vmem:[#allocation6 + $0x370] sm:$0xff]
        %v1000 = vld [vmem:[#allocation6 + $0x378] sm:$0xff]
        %v1001 = vld [vmem:[#allocation6 + $0x380] sm:$0xff]
        %v1002 = vld [vmem:[#allocation6 + $0x388] sm:$0xff]
        %v1003 = vld [vmem:[#allocation6 + $0x390] sm:$0xff]
        %v1004 = vld [vmem:[#allocation6 + $0x398] sm:$0xff]
        %v1005 = vld [vmem:[#allocation6 + $0x3a0] sm:$0xff]
        %v1006 = vld [vmem:[#allocation6 + $0x3a8] sm:$0xff]
        %v1007 = vld [vmem:[#allocation6 + $0x3b0] sm:$0xff]
        %v1008 = vld [vmem:[#allocation6 + $0x3b8] sm:$0xff]
        %v1009 = vld [vmem:[#allocation6 + $0x3c0] sm:$0xff]
        %v1010 = vld [vmem:[#allocation6 + $0x3c8] sm:$0xff]
        %v1011 = vld [vmem:[#allocation6 + $0x3d0] sm:$0xff]
        %v1012 = vld [vmem:[#allocation6 + $0x3d8] sm:$0xff]
        %v1013 = vld [vmem:[#allocation6 + $0x3e0] sm:$0xff]
        %v1014 = vld [vmem:[#allocation6 + $0x3e8] sm:$0xff]
        %v1015 = vld [vmem:[#allocation6 + $0x3f0] sm:$0xff]
        %v1016 = vld [vmem:[#allocation6 + $0x3f8] sm:$0xff]
        %s1017 = sld [smem:[#allocation2]]
        %v1018 = vstv %s1017
        %1019 = vmatprep.subr.mxu0 %v890
        %1020 = vmatpush1.msra.mxu0 %v889
        %1021 = vmatprep.subr.mxu0 %v892
        %1022 = vmatpush1.msra.mxu0 %v891
        %1023 = vmatprep.subr.mxu0 %v894
        %1024 = vmatpush1.msra.mxu0 %v893
        %1025 = vmatprep.subr.mxu0 %v896
        %1026 = vmatpush1.msra.mxu0 %v895
        %1027 = vmatprep.subr.mxu0 %v898
        %1028 = vmatpush1.msra.mxu0 %v897
        %1029 = vmatprep.subr.mxu0 %v900
        %1030 = vmatpush1.msra.mxu0 %v899
        %1031 = vmatprep.subr.mxu0 %v902
        %1032 = vmatpush1.msra.mxu0 %v901
        %1033 = vmatprep.subr.mxu0 %v904
        %1034 = vmatpush1.msra.mxu0 %v903
        %1035 = vmatprep.subr.mxu0 %v906
        %1036 = vmatpush1.msra.mxu0 %v905
        %1037 = vmatprep.subr.mxu0 %v908
        %1038 = vmatpush1.msra.mxu0 %v907
        %1039 = vmatprep.subr.mxu0 %v910
        %1040 = vmatpush1.msra.mxu0 %v909
        %1041 = vmatprep.subr.mxu0 %v912
        %1042 = vmatpush1.msra.mxu0 %v911
        %1043 = vmatprep.subr.mxu0 %v914
        %1044 = vmatpush1.msra.mxu0 %v913
        %1045 = vmatprep.subr.mxu0 %v916
        %1046 = vmatpush1.msra.mxu0 %v915
        %1047 = vmatprep.subr.mxu0 %v918
        %1048 = vmatpush1.msra.mxu0 %v917
        %1049 = vmatprep.subr.mxu0 %v920
        %1050 = vmatpush1.msra.mxu0 %v919
        %1051 = vmatprep.subr.mxu0 %v922
        %1052 = vmatpush1.msra.mxu0 %v921
        %1053 = vmatprep.subr.mxu0 %v924
        %1054 = vmatpush1.msra.mxu0 %v923
        %1055 = vmatprep.subr.mxu0 %v926
        %1056 = vmatpush1.msra.mxu0 %v925
        %1057 = vmatprep.subr.mxu0 %v928
        %1058 = vmatpush1.msra.mxu0 %v927
        %1059 = vmatprep.subr.mxu0 %v930
        %1060 = vmatpush1.msra.mxu0 %v929
        %1061 = vmatprep.subr.mxu0 %v932
        %1062 = vmatpush1.msra.mxu0 %v931
        %1063 = vmatprep.subr.mxu0 %v934
        %1064 = vmatpush1.msra.mxu0 %v933
        %1065 = vmatprep.subr.mxu0 %v936
        %1066 = vmatpush1.msra.mxu0 %v935
        %1067 = vmatprep.subr.mxu0 %v938
        %1068 = vmatpush1.msra.mxu0 %v937
        %1069 = vmatprep.subr.mxu0 %v940
        %1070 = vmatpush1.msra.mxu0 %v939
        %1071 = vmatprep.subr.mxu0 %v942
        %1072 = vmatpush1.msra.mxu0 %v941
        %1073 = vmatprep.subr.mxu0 %v944
        %1074 = vmatpush1.msra.mxu0 %v943
        %1075 = vmatprep.subr.mxu0 %v946
        %1076 = vmatpush1.msra.mxu0 %v945
        %1077 = vmatprep.subr.mxu0 %v948
        %1078 = vmatpush1.msra.mxu0 %v947
        %1079 = vmatprep.subr.mxu0 %v950
        %1080 = vmatpush1.msra.mxu0 %v949
        %1081 = vmatprep.subr.mxu0 %v952
        %1082 = vmatpush1.msra.mxu0 %v951
        %1083 = vmatprep.mubr.f32.mxu0 %v878
        %1084 = vmatmul.mubr.f32.gmra.mrb[0].mxu0 %v877
        %v1085 = vpop.f32.mrb[0].mxu0
        %v1086 = vadd.f32 %v1018, %v1085
        %v1087 = vpop.f32.mrb[0].mxu0
        %v1088 = vadd.f32 %v1018, %v1087
        %1089 = vdwg.mxu0
        %1090 = vmatprep.subr.mxu0 %v954
        %1091 = vmatpush1.msra.mxu0 %v953
        %1092 = vmatprep.subr.mxu0 %v956
        %1093 = vmatpush1.msra.mxu0 %v955
        %1094 = vmatprep.subr.mxu0 %v958
        %1095 = vmatpush1.msra.mxu0 %v957
        %1096 = vmatprep.subr.mxu0 %v960
        %1097 = vmatpush1.msra.mxu0 %v959
        %1098 = vmatprep.subr.mxu0 %v962
        %1099 = vmatpush1.msra.mxu0 %v961
        %1100 = vmatprep.subr.mxu0 %v964
        %1101 = vmatpush1.msra.mxu0 %v963
        %1102 = vmatprep.subr.mxu0 %v966
        %1103 = vmatpush1.msra.mxu0 %v965
        %1104 = vmatprep.subr.mxu0 %v968
        %1105 = vmatpush1.msra.mxu0 %v967
        %1106 = vmatprep.subr.mxu0 %v970
        %1107 = vmatpush1.msra.mxu0 %v969
        %1108 = vmatprep.subr.mxu0 %v972
        %1109 = vmatpush1.msra.mxu0 %v971
        %1110 = vmatprep.subr.mxu0 %v974
        %1111 = vmatpush1.msra.mxu0 %v973
        %1112 = vmatprep.subr.mxu0 %v976
        %1113 = vmatpush1.msra.mxu0 %v975
        %1114 = vmatprep.subr.mxu0 %v978
        %1115 = vmatpush1.msra.mxu0 %v977
        %1116 = vmatprep.subr.mxu0 %v980
        %1117 = vmatpush1.msra.mxu0 %v979
        %1118 = vmatprep.subr.mxu0 %v982
        %1119 = vmatpush1.msra.mxu0 %v981
        %1120 = vmatprep.subr.mxu0 %v984
        %1121 = vmatpush1.msra.mxu0 %v983
        %1122 = vmatprep.subr.mxu0 %v986
        %1123 = vmatpush1.msra.mxu0 %v985
        %1124 = vmatprep.subr.mxu0 %v988
        %1125 = vmatpush1.msra.mxu0 %v987
        %1126 = vmatprep.subr.mxu0 %v990
        %1127 = vmatpush1.msra.mxu0 %v989
        %1128 = vmatprep.subr.mxu0 %v992
        %1129 = vmatpush1.msra.mxu0 %v991
        %1130 = vmatprep.subr.mxu0 %v994
        %1131 = vmatpush1.msra.mxu0 %v993
        %1132 = vmatprep.subr.mxu0 %v996
        %1133 = vmatpush1.msra.mxu0 %v995
        %1134 = vmatprep.subr.mxu0 %v998
        %1135 = vmatpush1.msra.mxu0 %v997
        %1136 = vmatprep.subr.mxu0 %v1000
        %1137 = vmatpush1.msra.mxu0 %v999
        %1138 = vmatprep.subr.mxu0 %v1002
        %1139 = vmatpush1.msra.mxu0 %v1001
        %1140 = vmatprep.subr.mxu0 %v1004
        %1141 = vmatpush1.msra.mxu0 %v1003
        %1142 = vmatprep.subr.mxu0 %v1006
        %1143 = vmatpush1.msra.mxu0 %v1005
        %1144 = vmatprep.subr.mxu0 %v1008
        %1145 = vmatpush1.msra.mxu0 %v1007
        %1146 = vmatprep.subr.mxu0 %v1010
        %1147 = vmatpush1.msra.mxu0 %v1009
        %1148 = vmatprep.subr.mxu0 %v1012
        %1149 = vmatpush1.msra.mxu0 %v1011
        %1150 = vmatprep.subr.mxu0 %v1014
        %1151 = vmatpush1.msra.mxu0 %v1013
        %1152 = vmatprep.subr.mxu0 %v1016
        %1153 = vmatpush1.msra.mxu0 %v1015
        %1154 = vmatprep.mubr.f32.mxu0 %v886
        %1155 = vmatmul.mubr.f32.gmra.mrb[0].mxu0 %v885
        %v1156 = vpop.f32.mrb[0].mxu0
        %v1157 = vadd.f32 %v1086, %v1156
        %v1158 = vpop.f32.mrb[0].mxu0
        %v1159 = vadd.f32 %v1088, %v1158
        %1160 = vdwg.mxu0
        %v1161 = vxor.u32 %v1157, 2147483648
        %v1162 = vxor.u32 %v1159, 2147483648
        %v1163 = vmul.f32 %v1161, 1.442695
        %v1164 = vpow.pop %v1163
        %v1165 = vmul.f32 %v1162, 1.442695
        %v1166 = vpow.pop %v1165
        %v1167 = vadd.f32 %v1164, 1.0
        %v1168 = vadd.f32 %v1166, 1.0
        %v1169 = vrcp.pop %v1167
        %v1170 = vmul.f32 1.0, %v1169
        %v1171 = vrcp.pop %v1168
        %v1172 = vmul.f32 1.0, %v1171
        %v1175 = vcombine.low %v1170, %v1172
        %v1177 = vunpack.c.l.s4 1966171168
        %v1178 = vunpack.c.0.s8 %v1177
        %v1179 = vlaneseq
        %v1180 = vshrl.u32 %v1179, 7
        %v1181 = vsub.s32 %v1178, %v1180
        %v1182 = vrot.slane %v1175, %v1181
        %v1183 = vcombine.high %v1182, %v1182
        %v1185 = vunpack.c.l.s4 1966171168
        %v1186 = vunpack.c.0.s8 %v1185
        %v1187 = vlaneseq
        %v1188 = vshrl.u32 %v1187, 7
        %v1189 = vsub.s32 %v1186, %v1188
        %v1190 = vrot.slane %v1182, %v1189
        %v1192 = vunpack.c.l.s4 1966171168
        %v1193 = vunpack.c.0.s8 %v1192
        %v1194 = vlaneseq
        %v1195 = vshrl.u32 %v1194, 7
        %v1196 = vsub.s32 %v1193, %v1195
        %v1197 = vrot.slane %v1183, %v1196
        %v1198 = vlaneseq
        %v1199 = vshrl.u32 %v1198, 7
        %v1200 = vsub.s32 0, %v1199
        %v1201 = vrot.slane %v1190, %v1200
        %v1202 = vlaneseq
        %v1203 = vshrl.u32 %v1202, 7
        %v1204 = vsub.s32 1, %v1203
        %v1205 = vrot.slane %v1190, %v1204
        %v1206 = vlaneseq
        %v1207 = vshrl.u32 %v1206, 7
        %v1208 = vsub.s32 0, %v1207
        %v1209 = vrot.slane %v1197, %v1208
        %v1210 = vlaneseq
        %v1211 = vshrl.u32 %v1210, 7
        %v1212 = vsub.s32 1, %v1211
        %v1213 = vrot.slane %v1197, %v1212
        %v1218 = vmul.f32 %v781, %v1201
        %v1219 = vmul.f32 %v782, %v1205
        %v1220 = vmul.f32 %v783, %v1201
        %v1221 = vmul.f32 %v784, %v1205
        %v1222 = vmul.f32 %v785, %v1201
        %v1223 = vmul.f32 %v786, %v1205
        %v1224 = vmul.f32 %v787, %v1201
        %v1225 = vmul.f32 %v788, %v1205
        %v1226 = vmul.f32 %v789, %v1209
        %v1227 = vmul.f32 %v790, %v1213
        %v1228 = vmul.f32 %v791, %v1209
        %v1229 = vmul.f32 %v792, %v1213
        %v1230 = vmul.f32 %v793, %v1209
        %v1231 = vmul.f32 %v794, %v1213
        %v1232 = vmul.f32 %v795, %v1209
        %v1233 = vmul.f32 %v796, %v1213
        %1234 = vst [vmem:[%s313] sm:$0xff] %v1218
        %1235 = vst [vmem:[%s313 + $0x8] sm:$0xff] %v1219
        %1236 = vst [vmem:[%s313 + $0x10] sm:$0xff] %v1220
        %1237 = vst [vmem:[%s313 + $0x18] sm:$0xff] %v1221
        %1238 = vst [vmem:[%s313 + $0x20] sm:$0xff] %v1222
        %1239 = vst [vmem:[%s313 + $0x28] sm:$0xff] %v1223
        %1240 = vst [vmem:[%s313 + $0x30] sm:$0xff] %v1224
        %1241 = vst [vmem:[%s313 + $0x38] sm:$0xff] %v1225
        %1242 = vst [vmem:[%s313 + $0x40] sm:$0xff] %v1226
        %1243 = vst [vmem:[%s313 + $0x48] sm:$0xff] %v1227
        %1244 = vst [vmem:[%s313 + $0x50] sm:$0xff] %v1228
        %1245 = vst [vmem:[%s313 + $0x58] sm:$0xff] %v1229
        %1246 = vst [vmem:[%s313 + $0x60] sm:$0xff] %v1230
        %1247 = vst [vmem:[%s313 + $0x68] sm:$0xff] %v1231
        %1248 = vst [vmem:[%s313 + $0x70] sm:$0xff] %v1232
        %1249 = vst [vmem:[%s313 + $0x78] sm:$0xff] %v1233
        %s1250 = sand.u32 %s186, 1
        %s1251 = scalar_lea.sflag [#allocation5], %s1250
        %s1252 = sand.u32 %s186, 1
        %s1253 = smul.addr %s1252, 128
        %s1254 = scalar_lea.vmem [#allocation8], %s1253
        // Predicated region
        $region57: #{tpu_custom_call.1} parent=47 // pred_check
          %p1255 = pneg %p196
        $region58: #{tpu_custom_call.1} parent=47 // pred_check_branch
          %1257 = sbr.rel (%p1255) target = $region60
        $region59: #{tpu_custom_call.1} parent=47 // pred_region
          %s1258 = smul.u32 2, %s26
          %s1260 = ssub.s32 2048, 2048
          %1261 = vsyncadd %s1251, %s1260
          %s1262 = smul.addr %s1258, 8
          %s1263 = smul.addr %s1262, 128
          %s1264 = scalar_lea.hbm %s7, %s1263
          %s1265 = sshll.u32 %s1254, 4
          %s1266 = int_to_ptr.vmem [resolvable:$true] %s1265
          %1271 = dma.vmem_to_hbm [thread:$0]  %s1266, 2048, %s1264, %s1251, 256, 256, 16
        $region60: #{tpu_custom_call.1} parent=47 // pred_fallthru
          _
      $region48: #{tpu_custom_call.1} parent=5 // pred_fallthru
        _
      %p1272 = scmp.le.s32.totalorder 2, %s21
      // Predicated region
      $region61: #{tpu_custom_call.1} parent=5 // pred_check
        %p1273 = pneg %p1272
      $region62: #{tpu_custom_call.1} parent=5 // pred_check_branch
        %1275 = sbr.rel (%p1273) target = $region64
      $region63: #{tpu_custom_call.1} parent=5 // pred_region
        %s1276 = ssub.s32 %s21, 2
        // Predicated region
        $region65: #{tpu_custom_call.1} parent=63 // pred_check
          %p1277 = pneg %p202
        $region66: #{tpu_custom_call.1} parent=63 // pred_check_branch
          %1279 = sbr.rel (%p1277) target = $region68
        $region67: #{tpu_custom_call.1} parent=63 // pred_region
          %s1280 = sand.u32 %s187, 1
          %s1281 = scalar_lea.sflag [#allocation5], %s1280
          %s1282 = sand.u32 %s187, 1
          %s1283 = smul.addr %s1282, 128
          %s1284 = scalar_lea.vmem [#allocation8], %s1283
          %1285 = dma.done %s1281, 2048
        $region68: #{tpu_custom_call.1} parent=63 // pred_fallthru
          _
      $region64: #{tpu_custom_call.1} parent=5 // pred_fallthru
        _
    $region6: #{tpu_custom_call.1} parent=1 // loop_footer
      %s25 = sadd.s32 1, %s21
    $region7: #{tpu_custom_call.1} parent=1 // loop_footer_branch
      %20 = sbr.rel target = $region3
    $region8: #{tpu_custom_call.1} parent=1 // loop_exit
      _
    %1286 = vsyncpa [#allocation4], 1
    %s1287 = scalar_lea.sflag [#allocation4], 1
    %1288 = vsyncpa %s1287, 1
    %1289 = vsyncpa [#allocation7], 1
    %1290 = vsyncpa [#allocation5], 1
    %s1291 = scalar_lea.sflag [#allocation5], 1
    %1292 = vsyncpa %s1291, 1

</llo_original>
